<compile_context>
chip_gen: v6e
topology: v6e:2x2x1
jax: 0.10.0
libtpu: 0.0.40
codegen_flags: <defaults>
</compile_context>

<pallas_src>
import functools

import jax
import jax.numpy as jnp
from jax import lax
from jax.experimental import pallas as pl
from jax.experimental.pallas import tpu as pltpu

block_size = 8     # T (max sequence length; tril buffer size)
n_embed = 32       # C
num_heads = 4
head_size = 8      # per-head dim; concat gives num_heads*head_size = 32


def _mha_kernel(x_ref, w_qkv_ref, o_ref, *, heads, hdim):
    """Single invocation (grid=()): all batches and heads at once.

    x_ref     : (B, T, C)        VMEM
    w_qkv_ref : (C, 3*H*hs)      VMEM, columns ordered [q heads | k heads | v heads],
                                 with C**-0.5 pre-folded into the q columns.
    o_ref     : (B, T, H*hs)     VMEM, heads concatenated along the last dim.
    """
    B, T, C = x_ref.shape
    H, hs = heads, hdim
    BH = B * H

    # ---- fused projection: one MXU matmul for q, k, v of every head -------
    x2 = x_ref[...].reshape(B * T, C)                            # (B*T, C)
    qkv = jnp.dot(x2, w_qkv_ref[...],
                  preferred_element_type=jnp.float32)            # (B*T, 3*H*hs)

    # ---- one head-batched relayout (no per-head sub-vreg lane slices) -----
    # (B*T, 3*H*hs) -> (B, T, 3*H*hs) -> minor-dim transpose -> (B, 3*H*hs, T)
    # -> tile-aligned sublane split -> (B, 3*H, hs, T).  Per-head data now
    # lives on a major axis, so q/k/v extraction is a cheap major-axis slice.
    qkv_t = jnp.swapaxes(qkv.reshape(B, T, 3 * H * hs), 1, 2)    # (B, 3*H*hs, T)
    qkv_t = qkv_t.reshape(B, 3 * H, hs, T)                       # (B, 3H, hs, T)

    q_t = qkv_t[:, 0 * H:1 * H].reshape(BH, hs, T)               # q^T per (b, h)
    k_t = qkv_t[:, 1 * H:2 * H].reshape(BH, hs, T)               # k^T per (b, h)
    v_t = qkv_t[:, 2 * H:3 * H].reshape(BH, hs, T)               # v^T per (b, h)

    q = jnp.swapaxes(q_t, 1, 2)                                  # (BH, T, hs)

    # ---- ONE batched matmul for all (b, h) score matrices -----------------
    # (scale C**-0.5 was folded into the q weight columns on the wrapper side)
    s = jnp.einsum("xtd,xdj->xtj", q, k_t,
                   preferred_element_type=jnp.float32)           # (BH, T, T)

    # Causal (tril) mask: a single 2-D (T, T) iota/compare, broadcast over (b, h).
    row = lax.broadcasted_iota(jnp.int32, (T, T), 0)
    col = lax.broadcasted_iota(jnp.int32, (T, T), 1)
    causal = (col <= row)[None, :, :]                            # (1, T, T)
    # Diagonal is always unmasked, so the softmax denominator is > 0.
    # TODO(synk): if padded / fully-masked rows are ever introduced, replace
    # -inf with a large finite negative (or a row-valid mask) to avoid NaNs.
    s = jnp.where(causal, s, -jnp.inf)

    # ---- numerically stable softmax (reciprocal on the EUP slot) ----------
    m = jnp.max(s, axis=-1, keepdims=True)
    p = jnp.exp(s - m)
    denom = jnp.sum(p, axis=-1, keepdims=True)
    p = p * pl.reciprocal(denom, approx=True)

    # ---- ONE batched matmul for all (b, h) p @ v ---------------------------
    # Computed in transposed form out^T[x, d, t] so the head axis merges back
    # into the feature axis with a tile-aligned reshape; one minor-dim
    # transpose then yields the concatenated-heads slab (no jnp.concatenate).
    out_t = jnp.einsum("xdj,xtj->xdt", v_t, p,
                       preferred_element_type=jnp.float32)       # (BH, hs, T)
    o = jnp.swapaxes(out_t.reshape(B, H * hs, T), 1, 2)          # (B, T, H*hs)

    # Single full-ref store of the whole output slab.
    # (At these toy sizes the output is 2 KiB / two vregs; at production sizes
    #  present a >=128-lane slab instead, per the lane-dense-store guideline.)
    o_ref[...] = o.astype(o_ref.dtype)


def fuse_qkv_weights(w_key, w_query, w_value):
    """One-time weight preparation (do at init, NOT per forward call).

    Stacked per-head weights (H, C, hs) -> fused (C, 3*H*hs) with column order
    [q heads | k heads | v heads] and the attention scale C**-0.5 folded into
    the q columns, so the kernel performs no per-head scaling.
    """
    H, C, hs = w_key.shape
    scale = jnp.asarray(C, w_query.dtype) ** -0.5

    def _flat(w):                      # (H, C, hs) -> (C, H*hs)
        return jnp.transpose(w, (1, 0, 2)).reshape(C, H * hs)

    return jnp.concatenate(
        [_flat(w_query) * scale, _flat(w_key), _flat(w_value)], axis=-1)


def multi_head_attention(x, w_qkv, num_heads, head_size):
    """x: (B, T, C); w_qkv: fused (C, 3*H*hs). Returns (B, T, H*hs)."""
    B, T, C = x.shape
    H, hs = num_heads, head_size
    assert w_qkv.shape == (C, 3 * H * hs)
    assert T % 8 == 0 and hs % 8 == 0, "tile-aligned relayouts assume multiples of 8"

    itemsize = jnp.dtype(x.dtype).itemsize
    cost = pl.CostEstimate(
        flops=2 * B * T * C * 3 * H * hs + 2 * 2 * B * H * T * T * hs,
        transcendentals=B * H * T * T + B * H * T,
        bytes_accessed=(x.size + w_qkv.size + B * T * H * hs) * itemsize,
    )

    # Whole problem is ~20 KiB -> single invocation, everything VMEM-resident.
    # TODO(synk): at production sizes add a "parallel" grid axis over B (v7x
    # has 2 TensorCores) with (8,128)-aligned BlockSpec tiles re-sized for the
    # 64 MiB v7x VMEM; at this size grid overhead outweighs the benefit.
    return pl.pallas_call(
        functools.partial(_mha_kernel, heads=H, hdim=hs),
        out_shape=jax.ShapeDtypeStruct((B, T, H * hs), x.dtype),
        in_specs=[
            pl.BlockSpec(memory_space=pltpu.MemorySpace.VMEM),   # x, whole array
            pl.BlockSpec(memory_space=pltpu.MemorySpace.VMEM),   # fused W_qkv
        ],
        out_specs=pl.BlockSpec(memory_space=pltpu.MemorySpace.VMEM),
        cost_estimate=cost,
    )(x, w_qkv)


def _reference(x, w_key, w_query, w_value):
    """Pure-JAX reference reproducing the PyTorch forward."""
    B, T, C = x.shape
    outs = []
    for h in range(w_key.shape[0]):
        k = x @ w_key[h]
        q = x @ w_query[h]
        v = x @ w_value[h]
        wei = (q @ jnp.swapaxes(k, -2, -1)) * (C ** -0.5)
        mask = jnp.tril(jnp.ones((T, T), dtype=bool))
        wei = jnp.where(mask, wei, -jnp.inf)
        wei = jax.nn.softmax(wei, axis=-1)
        outs.append(wei @ v)
    return jnp.concatenate(outs, axis=-1)


if __name__ == "__main__":
    key = jax.random.PRNGKey(0)
    kx, kk, kq, kv = jax.random.split(key, 4)

    B, T, C = 2, block_size, n_embed
    x = jax.random.normal(kx, (B, T, C), dtype=jnp.float32)

    # Deterministic synthetic weights, stacked per head: (H, C, head_size).
    wscale = 1.0 / jnp.sqrt(jnp.float32(C))
    w_key = jax.random.normal(kk, (num_heads, C, head_size), jnp.float32) * wscale
    w_query = jax.random.normal(kq, (num_heads, C, head_size), jnp.float32) * wscale
    w_value = jax.random.normal(kv, (num_heads, C, head_size), jnp.float32) * wscale

    # One-time weight fusion + scale fold (hoisted out of the per-call path).
    w_qkv = fuse_qkv_weights(w_key, w_query, w_value)

    out = multi_head_attention(x, w_qkv, num_heads, head_size)
    out = jax.block_until_ready(out)

    ref = _reference(x, w_key, w_query, w_value)
    assert out.shape == (B, T, num_heads * head_size)
    # Tolerance accounts for the approximate (EUP) reciprocal in the softmax
    # and the weight-side scale fold.
    assert jnp.allclose(out, ref, atol=2e-3, rtol=2e-3), \
        float(jnp.max(jnp.abs(out - ref)))

    print("KERNEL_OK")
</pallas_src>

<mosaic_0001>
module attributes {stable_mosaic.version = 11 : i64} {
  func.func @_mha_kernel(%arg0: memref<2x8x32xf32, #tpu.memory_space<vmem>>, %arg1: memref<32x96xf32, #tpu.memory_space<vmem>>, %arg2: memref<2x8x32xf32, #tpu.memory_space<vmem>>) attributes {dimension_semantics = [], scalar_prefetch = 0 : i64, scratch_operands = 0 : i64, tpu.core_type = #tpu.core_type<tc>} {
    %c0 = arith.constant 0 : index
    %c0_0 = arith.constant 0 : index
    %c0_1 = arith.constant 0 : index
    %0 = vector.load %arg0[%c0, %c0_0, %c0_1] : memref<2x8x32xf32, #tpu.memory_space<vmem>>, vector<2x8x32xf32>
    %1 = vector.shape_cast %0 : vector<2x8x32xf32> to vector<16x32xf32>
    %c0_2 = arith.constant 0 : index
    %c0_3 = arith.constant 0 : index
    %2 = vector.load %arg1[%c0_2, %c0_3] : memref<32x96xf32, #tpu.memory_space<vmem>>, vector<32x96xf32>
    %cst = arith.constant dense<0.000000e+00> : vector<16x96xf32>
    %3 = tpu.matmul %1, %2, %cst {dimension_numbers = #tpu.dot_dimension_numbers<[1], [0], [0], [1], [0, 0, 1, 1], [], []>} : vector<16x32xf32>, vector<32x96xf32>, vector<16x96xf32> -> vector<16x96xf32>
    %4 = vector.shape_cast %3 : vector<16x96xf32> to vector<2x8x96xf32>
    %5 = tpu.transpose %4, [0, 2, 1] : vector<2x8x96xf32> -> vector<2x96x8xf32>
    %6 = vector.shape_cast %5 : vector<2x96x8xf32> to vector<2x12x8x8xf32>
    %7 = vector.extract_strided_slice %6 {offsets = [0, 0, 0, 0], sizes = [2, 4, 8, 8], strides = [1, 1, 1, 1]} : vector<2x12x8x8xf32> to vector<2x4x8x8xf32>
    %8 = vector.shape_cast %7 : vector<2x4x8x8xf32> to vector<8x8x8xf32>
    %9 = vector.extract_strided_slice %6 {offsets = [0, 4, 0, 0], sizes = [2, 4, 8, 8], strides = [1, 1, 1, 1]} : vector<2x12x8x8xf32> to vector<2x4x8x8xf32>
    %10 = vector.shape_cast %9 : vector<2x4x8x8xf32> to vector<8x8x8xf32>
    %11 = vector.extract_strided_slice %6 {offsets = [0, 8, 0, 0], sizes = [2, 4, 8, 8], strides = [1, 1, 1, 1]} : vector<2x12x8x8xf32> to vector<2x4x8x8xf32>
    %12 = vector.shape_cast %11 : vector<2x4x8x8xf32> to vector<8x8x8xf32>
    %13 = tpu.transpose %8, [0, 2, 1] : vector<8x8x8xf32> -> vector<8x8x8xf32>
    "tpu.trace_start"() <{level = 10 : i32, message = "xtd,xdj->xtj"}> : () -> ()
    %cst_4 = arith.constant dense<0.000000e+00> : vector<8x8x8xf32>
    %14 = tpu.matmul %13, %10, %cst_4 {dimension_numbers = #tpu.dot_dimension_numbers<[2], [1], [1], [2], [0, 0, 0, 1, 1, 2], [0], [0]>} : vector<8x8x8xf32>, vector<8x8x8xf32>, vector<8x8x8xf32> -> vector<8x8x8xf32>
    "tpu.trace_stop"() : () -> ()
    %15 = tpu.iota {dimensions = array<i32: 0>} : vector<8x8xi32>
    %16 = tpu.iota {dimensions = array<i32: 1>} : vector<8x8xi32>
    %17 = arith.cmpi sle, %16, %15 : vector<8x8xi32>
    %18 = vector.shape_cast %17 : vector<8x8xi1> to vector<1x8x8xi1>
    %cst_5 = arith.constant 0xFF800000 : f32
    %19 = vector.shape_cast %18 : vector<1x8x8xi1> to vector<1x8x8xi1>
    %20 = vector.broadcast %19 : vector<1x8x8xi1> to vector<8x8x8xi1>
    %21 = vector.broadcast %cst_5 : f32 to vector<8x8x8xf32>
    %22 = arith.select %20, %14, %21 : vector<8x8x8xi1>, vector<8x8x8xf32>
    %cst_6 = arith.constant dense<0xFF800000> : vector<8x8xf32>
    %23 = vector.multi_reduction <maximumf>, %22, %cst_6 [2] : vector<8x8x8xf32> to vector<8x8xf32>
    %24 = vector.shape_cast %23 : vector<8x8xf32> to vector<8x8x1xf32>
    %25 = vector.broadcast %24 : vector<8x8x1xf32> to vector<8x8x8xf32>
    %26 = arith.subf %22, %25 : vector<8x8x8xf32>
    %27 = math.exp %26 : vector<8x8x8xf32>
    %cst_7 = arith.constant dense<0.000000e+00> : vector<8x8xf32>
    %28 = vector.multi_reduction <add>, %27, %cst_7 [2] : vector<8x8x8xf32> to vector<8x8xf32>
    %29 = vector.shape_cast %28 : vector<8x8xf32> to vector<8x8x1xf32>
    %30 = tpu.reciprocal %29 {approx = true} : vector<8x8x1xf32> -> vector<8x8x1xf32>
    %31 = vector.broadcast %30 : vector<8x8x1xf32> to vector<8x8x8xf32>
    %32 = arith.mulf %27, %31 : vector<8x8x8xf32>
    "tpu.trace_start"() <{level = 10 : i32, message = "xdj,xtj->xdt"}> : () -> ()
    %cst_8 = arith.constant dense<0.000000e+00> : vector<8x8x8xf32>
    %33 = tpu.matmul %12, %32, %cst_8 {dimension_numbers = #tpu.dot_dimension_numbers<[2], [2], [1], [1], [0, 0, 0, 1, 1, 1], [0], [0]>} : vector<8x8x8xf32>, vector<8x8x8xf32>, vector<8x8x8xf32> -> vector<8x8x8xf32>
    "tpu.trace_stop"() : () -> ()
    %34 = vector.shape_cast %33 : vector<8x8x8xf32> to vector<2x32x8xf32>
    %35 = tpu.transpose %34, [0, 2, 1] : vector<2x32x8xf32> -> vector<2x8x32xf32>
    %c0_9 = arith.constant 0 : index
    %c0_10 = arith.constant 0 : index
    %c0_11 = arith.constant 0 : index
    %36 = vector.load %arg2[%c0_9, %c0_10, %c0_11] : memref<2x8x32xf32, #tpu.memory_space<vmem>>, vector<2x8x32xf32>
    tpu.vector_store %arg2[%c0_9, %c0_10, %c0_11], %35 {strides = array<i32>} : memref<2x8x32xf32, #tpu.memory_space<vmem>>, vector<2x8x32xf32>,
    return
  }
}

</mosaic_0001>

<llo_original>
// kernel: tpu_custom_call.1
$region0: #{tpu_custom_call.1}
  #allocation0 [shape = 'u32[]', space=smem, size = 0x4, offset = 0x4, fixed_abs, tag = 'smem constant byte address 0x4 - core index']
  #allocation1 [shape = 'u32[144,128]{1,0:T(1,128)}', space=vmem, size = 0x12000, scoped, tag = 'internal scratch']
  %s0 = inlined_call_operand.hbm [shape: f32[2,8,32], index: 0, kind: input, shape index: {}]
  %s1 = inlined_call_operand.hbm [shape: f32[32,96], index: 1, kind: input, shape index: {}]
  %s2 = inlined_call_operand.hbm [shape: f32[2,8,32], index: 2, kind: output, shape index: {}]
  %s3 = sld [smem:[#allocation0]]
  $region26: #{tpu_custom_call.1} parent=0
    _
  %s5 = ssub.s32 1, %s3
  %s6 = scalar_select 0, %s5, %s3
  $region1: #{tpu_custom_call.1} parent=0
    #allocation2 [shape = 'u8[8192]{0}', space=vmem, size = 0x2000, scoped, tag = 'input window, operand 0, single buffered']
    #allocation3 [shape = 's32[1]{0}', space=sflag, size = 0x4, scoped, tag = 'scoped memory for tpu_custom_call.1']
    #allocation4 [shape = 's32[1]{0}', space=sflag, size = 0x4, scoped, tag = 'scoped memory for tpu_custom_call.1']
    #allocation5 [shape = 'u8[16384]{0}', space=vmem, size = 0x4000, scoped, tag = 'input window, operand 1, single buffered']
    #allocation6 [shape = 's32[1]{0}', space=sflag, size = 0x4, scoped, tag = 'scoped memory for tpu_custom_call.1']
    #allocation7 [shape = 'u8[8192]{0}', space=vmem, size = 0x2000, scoped, tag = 'output window, operand 0, single buffered']
    %7 = vsyncpa [#allocation3], 0
    %8 = vsyncpa [#allocation6], 0
    %9 = vsyncpa [#allocation4], 0
    // Predicated region
    $region2: #{tpu_custom_call.1} parent=1 // pred_check
      _
    $region3: #{tpu_custom_call.1} parent=1 // pred_check_branch
      %11 = sbr.rel (0) target = $region5
    $region4: #{tpu_custom_call.1} parent=1 // pred_region
      %s13 = ssub.s32 256, 256
      %14 = vsyncadd [#allocation3], %s13
      %s15 = sshll.u32 [#allocation2], 4
      %s16 = int_to_ptr.vmem [resolvable:$true] %s15
      %21 = dma.hbm_to_vmem [thread:$0]  %s0, 256, %s16, [#allocation3], 128, 128, 8
    $region5: #{tpu_custom_call.1} parent=1 // pred_fallthru
      _
    // Predicated region
    $region6: #{tpu_custom_call.1} parent=1 // pred_check
      _
    $region7: #{tpu_custom_call.1} parent=1 // pred_check_branch
      %23 = sbr.rel (0) target = $region9
    $region8: #{tpu_custom_call.1} parent=1 // pred_region
      %s25 = ssub.s32 512, 512
      %26 = vsyncadd [#allocation6], %s25
      %s27 = sshll.u32 [#allocation5], 4
      %s28 = int_to_ptr.vmem [resolvable:$true] %s27
      %33 = dma.hbm_to_vmem [thread:$0]  %s1, 512, %s28, [#allocation6], 128, 128, 8
    $region9: #{tpu_custom_call.1} parent=1 // pred_fallthru
      _
    // Predicated region
    $region10: #{tpu_custom_call.1} parent=1 // pred_check
      _
    $region11: #{tpu_custom_call.1} parent=1 // pred_check_branch
      %35 = sbr.rel (0) target = $region13
    $region12: #{tpu_custom_call.1} parent=1 // pred_region
      %36 = dma.done [#allocation3], 256
    $region13: #{tpu_custom_call.1} parent=1 // pred_fallthru
      _
    // Predicated region
    $region14: #{tpu_custom_call.1} parent=1 // pred_check
      _
    $region15: #{tpu_custom_call.1} parent=1 // pred_check_branch
      %38 = sbr.rel (0) target = $region17
    $region16: #{tpu_custom_call.1} parent=1 // pred_region
      %39 = dma.done [#allocation6], 512
    $region17: #{tpu_custom_call.1} parent=1 // pred_fallthru
      _
    %v40 = vld [vmem:[#allocation2] sm:$0xff]
    %v41 = vld [vmem:[#allocation2 + $0x8] sm:$0xff]
    %v42 = vld [vmem:[#allocation5] sm:$0xff]
    %v43 = vld [vmem:[#allocation5 + $0x8] sm:$0xff]
    %v44 = vld [vmem:[#allocation5 + $0x10] sm:$0xff]
    %v45 = vld [vmem:[#allocation5 + $0x18] sm:$0xff]
    %vm46 = vcmask 261120
    %v48 = vsel %vm46, %v40, 0
    %v51 = vsel %vm46, %v41, 0
    %53 = vmatprep.subr.mxu0 0.0
    %54 = vmatpush1.msra.mxu0 0.0
    %55 = vmatprep.subr.mxu0 0.0
    %56 = vmatpush1.msra.mxu0 0.0
    %57 = vmatprep.subr.mxu0 0.0
    %58 = vmatpush1.msra.mxu0 0.0
    %59 = vmatprep.subr.mxu0 0.0
    %60 = vmatpush1.msra.mxu0 0.0
    %61 = vmatprep.subr.mxu0 0.0
    %62 = vmatpush1.msra.mxu0 0.0
    %63 = vmatprep.subr.mxu0 0.0
    %64 = vmatpush1.msra.mxu0 0.0
    %65 = vmatprep.subr.mxu0 0.0
    %66 = vmatpush1.msra.mxu0 0.0
    %67 = vmatprep.subr.mxu0 0.0
    %68 = vmatpush1.msra.mxu0 0.0
    %69 = vmatprep.subr.mxu0 0.0
    %70 = vmatpush1.msra.mxu0 0.0
    %71 = vmatprep.subr.mxu0 0.0
    %72 = vmatpush1.msra.mxu0 0.0
    %73 = vmatprep.subr.mxu0 0.0
    %74 = vmatpush1.msra.mxu0 0.0
    %75 = vmatprep.subr.mxu0 0.0
    %76 = vmatpush1.msra.mxu0 0.0
    %77 = vmatprep.subr.mxu0 0.0
    %78 = vmatpush1.msra.mxu0 %v45
    %79 = vmatprep.subr.mxu0 0.0
    %80 = vmatpush1.msra.mxu0 %v44
    %81 = vmatprep.subr.mxu0 0.0
    %82 = vmatpush1.msra.mxu0 %v43
    %83 = vmatprep.subr.mxu0 0.0
    %84 = vmatpush1.msra.mxu0 %v42
    %85 = vmatprep.subr.mxu0 0.0
    %86 = vmatpush2.msra.mxu0 0.0
    %87 = vmatprep.subr.mxu0 0.0
    %88 = vmatpush2.msra.mxu0 0.0
    %89 = vmatprep.subr.mxu0 0.0
    %90 = vmatpush2.msra.mxu0 0.0
    %91 = vmatprep.subr.mxu0 0.0
    %92 = vmatpush2.msra.mxu0 0.0
    %93 = vmatprep.subr.mxu0 0.0
    %94 = vmatpush2.msra.mxu0 0.0
    %95 = vmatprep.subr.mxu0 0.0
    %96 = vmatpush2.msra.mxu0 0.0
    %97 = vmatprep.subr.mxu0 0.0
    %98 = vmatpush2.msra.mxu0 0.0
    %99 = vmatprep.subr.mxu0 0.0
    %100 = vmatpush2.msra.mxu0 0.0
    %101 = vmatprep.subr.mxu0 0.0
    %102 = vmatpush2.msra.mxu0 0.0
    %103 = vmatprep.subr.mxu0 0.0
    %104 = vmatpush2.msra.mxu0 0.0
    %105 = vmatprep.subr.mxu0 0.0
    %106 = vmatpush2.msra.mxu0 0.0
    %107 = vmatprep.subr.mxu0 0.0
    %108 = vmatpush2.msra.mxu0 0.0
    %109 = vmatprep.subr.mxu0 0.0
    %110 = vmatpush2.msra.mxu0 0.0
    %111 = vmatprep.subr.mxu0 0.0
    %112 = vmatpush2.msra.mxu0 0.0
    %113 = vmatprep.subr.mxu0 0.0
    %114 = vmatpush2.msra.mxu0 0.0
    %115 = vmatprep.subr.mxu0 0.0
    %116 = vmatpush2.msra.mxu0 0.0
    %117 = vmatprep.mubr.f32.mxu0 0.0
    %118 = vmatmul.mubr.f32.gmra.mxu0 %v48
    %v119 = vpop.f32.mrf.mxu0
    %v120 = vadd.f32 0.0, %v119
    %v121 = vpop.f32.mrf.mxu0
    %122 = vmatprep.mubr.f32.mxu0 0.0
    %123 = vmatmul.mubr.f32.gmra.mxu0 %v51
    %v124 = vpop.f32.mrf.mxu0
    %v125 = vadd.f32 0.0, %v124
    %v126 = vpop.f32.mrf.mxu0
    %127 = vdwg.mxu0
    %128 = vxpose.xlu0.b32.start [1/16] %v120, 128
    %129 = vxpose.xlu0.b32.cont [2/16] 0.0, 128
    %130 = vxpose.xlu0.b32.cont [3/16] 0.0, 128
    %131 = vxpose.xlu0.b32.cont [4/16] 0.0, 128
    %132 = vxpose.xlu0.b32.cont [5/16] 0.0, 128
    %133 = vxpose.xlu0.b32.cont [6/16] 0.0, 128
    %134 = vxpose.xlu0.b32.cont [7/16] 0.0, 128
    %135 = vxpose.xlu0.b32.cont [8/16] 0.0, 128
    %136 = vxpose.xlu0.b32.cont [9/16] 0.0, 128
    %137 = vxpose.xlu0.b32.cont [10/16] 0.0, 128
    %138 = vxpose.xlu0.b32.cont [11/16] 0.0, 128
    %139 = vxpose.xlu0.b32.cont [12/16] 0.0, 128
    %140 = vxpose.xlu0.b32.cont [13/16] 0.0, 128
    %141 = vxpose.xlu0.b32.cont [14/16] 0.0, 128
    %142 = vxpose.xlu0.b32.cont [15/16] 0.0, 128
    %143 = vxpose.xlu0.b32.end [16/16] 0.0, 128
    %v144 = vpop.trf.xlu0
    %v145 = vpop.trf.xlu0
    %v146 = vpop.trf.xlu0
    %v147 = vpop.trf.xlu0
    %v148 = vpop.trf.xlu0
    %v149 = vpop.trf.xlu0
    %v150 = vpop.trf.xlu0
    %v151 = vpop.trf.xlu0
    %v152 = vpop.trf.xlu0
    %v153 = vpop.trf.xlu0
    %v154 = vpop.trf.xlu0
    %v155 = vpop.trf.xlu0
    %v156 = vpop.trf.xlu0
    %v157 = vpop.trf.xlu0
    %v158 = vpop.trf.xlu0
    %v159 = vpop.trf.xlu0
    %160 = vxpose.xlu0.b32.start [1/16] %v125, 128
    %161 = vxpose.xlu0.b32.cont [2/16] 0.0, 128
    %162 = vxpose.xlu0.b32.cont [3/16] 0.0, 128
    %163 = vxpose.xlu0.b32.cont [4/16] 0.0, 128
    %164 = vxpose.xlu0.b32.cont [5/16] 0.0, 128
    %165 = vxpose.xlu0.b32.cont [6/16] 0.0, 128
    %166 = vxpose.xlu0.b32.cont [7/16] 0.0, 128
    %167 = vxpose.xlu0.b32.cont [8/16] 0.0, 128
    %168 = vxpose.xlu0.b32.cont [9/16] 0.0, 128
    %169 = vxpose.xlu0.b32.cont [10/16] 0.0, 128
    %170 = vxpose.xlu0.b32.cont [11/16] 0.0, 128
    %171 = vxpose.xlu0.b32.cont [12/16] 0.0, 128
    %172 = vxpose.xlu0.b32.cont [13/16] 0.0, 128
    %173 = vxpose.xlu0.b32.cont [14/16] 0.0, 128
    %174 = vxpose.xlu0.b32.cont [15/16] 0.0, 128
    %175 = vxpose.xlu0.b32.end [16/16] 0.0, 128
    %v176 = vpop.trf.xlu0
    %v177 = vpop.trf.xlu0
    %v178 = vpop.trf.xlu0
    %v179 = vpop.trf.xlu0
    %v180 = vpop.trf.xlu0
    %v181 = vpop.trf.xlu0
    %v182 = vpop.trf.xlu0
    %v183 = vpop.trf.xlu0
    %v184 = vpop.trf.xlu0
    %v185 = vpop.trf.xlu0
    %v186 = vpop.trf.xlu0
    %v187 = vpop.trf.xlu0
    %v188 = vpop.trf.xlu0
    %v189 = vpop.trf.xlu0
    %v190 = vpop.trf.xlu0
    %v191 = vpop.trf.xlu0
    %192 = vxpose.xlu0.b32.start [1/16] %v144, 128
    %193 = vxpose.xlu0.b32.cont [2/16] 0.0, 128
    %194 = vxpose.xlu0.b32.cont [3/16] 0.0, 128
    %195 = vxpose.xlu0.b32.cont [4/16] 0.0, 128
    %196 = vxpose.xlu0.b32.cont [5/16] 0.0, 128
    %197 = vxpose.xlu0.b32.cont [6/16] 0.0, 128
    %198 = vxpose.xlu0.b32.cont [7/16] 0.0, 128
    %199 = vxpose.xlu0.b32.cont [8/16] 0.0, 128
    %200 = vxpose.xlu0.b32.cont [9/16] 0.0, 128
    %201 = vxpose.xlu0.b32.cont [10/16] 0.0, 128
    %202 = vxpose.xlu0.b32.cont [11/16] 0.0, 128
    %203 = vxpose.xlu0.b32.cont [12/16] 0.0, 128
    %204 = vxpose.xlu0.b32.cont [13/16] 0.0, 128
    %205 = vxpose.xlu0.b32.cont [14/16] 0.0, 128
    %206 = vxpose.xlu0.b32.cont [15/16] 0.0, 128
    %207 = vxpose.xlu0.b32.end [16/16] 0.0, 128
    %v208 = vpop.trf.xlu0
    %v209 = vpop.trf.xlu0
    %v210 = vpop.trf.xlu0
    %v211 = vpop.trf.xlu0
    %v212 = vpop.trf.xlu0
    %v213 = vpop.trf.xlu0
    %v214 = vpop.trf.xlu0
    %v215 = vpop.trf.xlu0
    %v216 = vpop.trf.xlu0
    %v217 = vpop.trf.xlu0
    %v218 = vpop.trf.xlu0
    %v219 = vpop.trf.xlu0
    %v220 = vpop.trf.xlu0
    %v221 = vpop.trf.xlu0
    %v222 = vpop.trf.xlu0
    %v223 = vpop.trf.xlu0
    %224 = vxpose.xlu0.b32.start [1/16] %v145, 128
    %225 = vxpose.xlu0.b32.cont [2/16] 0.0, 128
    %226 = vxpose.xlu0.b32.cont [3/16] 0.0, 128
    %227 = vxpose.xlu0.b32.cont [4/16] 0.0, 128
    %228 = vxpose.xlu0.b32.cont [5/16] 0.0, 128
    %229 = vxpose.xlu0.b32.cont [6/16] 0.0, 128
    %230 = vxpose.xlu0.b32.cont [7/16] 0.0, 128
    %231 = vxpose.xlu0.b32.cont [8/16] 0.0, 128
    %232 = vxpose.xlu0.b32.cont [9/16] 0.0, 128
    %233 = vxpose.xlu0.b32.cont [10/16] 0.0, 128
    %234 = vxpose.xlu0.b32.cont [11/16] 0.0, 128
    %235 = vxpose.xlu0.b32.cont [12/16] 0.0, 128
    %236 = vxpose.xlu0.b32.cont [13/16] 0.0, 128
    %237 = vxpose.xlu0.b32.cont [14/16] 0.0, 128
    %238 = vxpose.xlu0.b32.cont [15/16] 0.0, 128
    %239 = vxpose.xlu0.b32.end [16/16] 0.0, 128
    %v240 = vpop.trf.xlu0
    %v241 = vpop.trf.xlu0
    %v242 = vpop.trf.xlu0
    %v243 = vpop.trf.xlu0
    %v244 = vpop.trf.xlu0
    %v245 = vpop.trf.xlu0
    %v246 = vpop.trf.xlu0
    %v247 = vpop.trf.xlu0
    %v248 = vpop.trf.xlu0
    %v249 = vpop.trf.xlu0
    %v250 = vpop.trf.xlu0
    %v251 = vpop.trf.xlu0
    %v252 = vpop.trf.xlu0
    %v253 = vpop.trf.xlu0
    %v254 = vpop.trf.xlu0
    %v255 = vpop.trf.xlu0
    %256 = vxpose.xlu0.b32.start [1/16] %v146, 128
    %257 = vxpose.xlu0.b32.cont [2/16] 0.0, 128
    %258 = vxpose.xlu0.b32.cont [3/16] 0.0, 128
    %259 = vxpose.xlu0.b32.cont [4/16] 0.0, 128
    %260 = vxpose.xlu0.b32.cont [5/16] 0.0, 128
    %261 = vxpose.xlu0.b32.cont [6/16] 0.0, 128
    %262 = vxpose.xlu0.b32.cont [7/16] 0.0, 128
    %263 = vxpose.xlu0.b32.cont [8/16] 0.0, 128
    %264 = vxpose.xlu0.b32.cont [9/16] 0.0, 128
    %265 = vxpose.xlu0.b32.cont [10/16] 0.0, 128
    %266 = vxpose.xlu0.b32.cont [11/16] 0.0, 128
    %267 = vxpose.xlu0.b32.cont [12/16] 0.0, 128
    %268 = vxpose.xlu0.b32.cont [13/16] 0.0, 128
    %269 = vxpose.xlu0.b32.cont [14/16] 0.0, 128
    %270 = vxpose.xlu0.b32.cont [15/16] 0.0, 128
    %271 = vxpose.xlu0.b32.end [16/16] 0.0, 128
    %v272 = vpop.trf.xlu0
    %v273 = vpop.trf.xlu0
    %v274 = vpop.trf.xlu0
    %v275 = vpop.trf.xlu0
    %v276 = vpop.trf.xlu0
    %v277 = vpop.trf.xlu0
    %v278 = vpop.trf.xlu0
    %v279 = vpop.trf.xlu0
    %v280 = vpop.trf.xlu0
    %v281 = vpop.trf.xlu0
    %v282 = vpop.trf.xlu0
    %v283 = vpop.trf.xlu0
    %v284 = vpop.trf.xlu0
    %v285 = vpop.trf.xlu0
    %v286 = vpop.trf.xlu0
    %v287 = vpop.trf.xlu0
    %288 = vxpose.xlu0.b32.start [1/16] %v147, 128
    %289 = vxpose.xlu0.b32.cont [2/16] 0.0, 128
    %290 = vxpose.xlu0.b32.cont [3/16] 0.0, 128
    %291 = vxpose.xlu0.b32.cont [4/16] 0.0, 128
    %292 = vxpose.xlu0.b32.cont [5/16] 0.0, 128
    %293 = vxpose.xlu0.b32.cont [6/16] 0.0, 128
    %294 = vxpose.xlu0.b32.cont [7/16] 0.0, 128
    %295 = vxpose.xlu0.b32.cont [8/16] 0.0, 128
    %296 = vxpose.xlu0.b32.cont [9/16] 0.0, 128
    %297 = vxpose.xlu0.b32.cont [10/16] 0.0, 128
    %298 = vxpose.xlu0.b32.cont [11/16] 0.0, 128
    %299 = vxpose.xlu0.b32.cont [12/16] 0.0, 128
    %300 = vxpose.xlu0.b32.cont [13/16] 0.0, 128
    %301 = vxpose.xlu0.b32.cont [14/16] 0.0, 128
    %302 = vxpose.xlu0.b32.cont [15/16] 0.0, 128
    %303 = vxpose.xlu0.b32.end [16/16] 0.0, 128
    %v304 = vpop.trf.xlu0
    %v305 = vpop.trf.xlu0
    %v306 = vpop.trf.xlu0
    %v307 = vpop.trf.xlu0
    %v308 = vpop.trf.xlu0
    %v309 = vpop.trf.xlu0
    %v310 = vpop.trf.xlu0
    %v311 = vpop.trf.xlu0
    %v312 = vpop.trf.xlu0
    %v313 = vpop.trf.xlu0
    %v314 = vpop.trf.xlu0
    %v315 = vpop.trf.xlu0
    %v316 = vpop.trf.xlu0
    %v317 = vpop.trf.xlu0
    %v318 = vpop.trf.xlu0
    %v319 = vpop.trf.xlu0
    %320 = vxpose.xlu0.b32.start [1/16] %v176, 128
    %321 = vxpose.xlu0.b32.cont [2/16] 0.0, 128
    %322 = vxpose.xlu0.b32.cont [3/16] 0.0, 128
    %323 = vxpose.xlu0.b32.cont [4/16] 0.0, 128
    %324 = vxpose.xlu0.b32.cont [5/16] 0.0, 128
    %325 = vxpose.xlu0.b32.cont [6/16] 0.0, 128
    %326 = vxpose.xlu0.b32.cont [7/16] 0.0, 128
    %327 = vxpose.xlu0.b32.cont [8/16] 0.0, 128
    %328 = vxpose.xlu0.b32.cont [9/16] 0.0, 128
    %329 = vxpose.xlu0.b32.cont [10/16] 0.0, 128
    %330 = vxpose.xlu0.b32.cont [11/16] 0.0, 128
    %331 = vxpose.xlu0.b32.cont [12/16] 0.0, 128
    %332 = vxpose.xlu0.b32.cont [13/16] 0.0, 128
    %333 = vxpose.xlu0.b32.cont [14/16] 0.0, 128
    %334 = vxpose.xlu0.b32.cont [15/16] 0.0, 128
    %335 = vxpose.xlu0.b32.end [16/16] 0.0, 128
    %v336 = vpop.trf.xlu0
    %v337 = vpop.trf.xlu0
    %v338 = vpop.trf.xlu0
    %v339 = vpop.trf.xlu0
    %v340 = vpop.trf.xlu0
    %v341 = vpop.trf.xlu0
    %v342 = vpop.trf.xlu0
    %v343 = vpop.trf.xlu0
    %v344 = vpop.trf.xlu0
    %v345 = vpop.trf.xlu0
    %v346 = vpop.trf.xlu0
    %v347 = vpop.trf.xlu0
    %v348 = vpop.trf.xlu0
    %v349 = vpop.trf.xlu0
    %v350 = vpop.trf.xlu0
    %v351 = vpop.trf.xlu0
    %352 = vxpose.xlu0.b32.start [1/16] %v177, 128
    %353 = vxpose.xlu0.b32.cont [2/16] 0.0, 128
    %354 = vxpose.xlu0.b32.cont [3/16] 0.0, 128
    %355 = vxpose.xlu0.b32.cont [4/16] 0.0, 128
    %356 = vxpose.xlu0.b32.cont [5/16] 0.0, 128
    %357 = vxpose.xlu0.b32.cont [6/16] 0.0, 128
    %358 = vxpose.xlu0.b32.cont [7/16] 0.0, 128
    %359 = vxpose.xlu0.b32.cont [8/16] 0.0, 128
    %360 = vxpose.xlu0.b32.cont [9/16] 0.0, 128
    %361 = vxpose.xlu0.b32.cont [10/16] 0.0, 128
    %362 = vxpose.xlu0.b32.cont [11/16] 0.0, 128
    %363 = vxpose.xlu0.b32.cont [12/16] 0.0, 128
    %364 = vxpose.xlu0.b32.cont [13/16] 0.0, 128
    %365 = vxpose.xlu0.b32.cont [14/16] 0.0, 128
    %366 = vxpose.xlu0.b32.cont [15/16] 0.0, 128
    %367 = vxpose.xlu0.b32.end [16/16] 0.0, 128
    %v368 = vpop.trf.xlu0
    %v369 = vpop.trf.xlu0
    %v370 = vpop.trf.xlu0
    %v371 = vpop.trf.xlu0
    %v372 = vpop.trf.xlu0
    %v373 = vpop.trf.xlu0
    %v374 = vpop.trf.xlu0
    %v375 = vpop.trf.xlu0
    %v376 = vpop.trf.xlu0
    %v377 = vpop.trf.xlu0
    %v378 = vpop.trf.xlu0
    %v379 = vpop.trf.xlu0
    %v380 = vpop.trf.xlu0
    %v381 = vpop.trf.xlu0
    %v382 = vpop.trf.xlu0
    %v383 = vpop.trf.xlu0
    %384 = vxpose.xlu0.b32.start [1/16] %v178, 128
    %385 = vxpose.xlu0.b32.cont [2/16] 0.0, 128
    %386 = vxpose.xlu0.b32.cont [3/16] 0.0, 128
    %387 = vxpose.xlu0.b32.cont [4/16] 0.0, 128
    %388 = vxpose.xlu0.b32.cont [5/16] 0.0, 128
    %389 = vxpose.xlu0.b32.cont [6/16] 0.0, 128
    %390 = vxpose.xlu0.b32.cont [7/16] 0.0, 128
    %391 = vxpose.xlu0.b32.cont [8/16] 0.0, 128
    %392 = vxpose.xlu0.b32.cont [9/16] 0.0, 128
    %393 = vxpose.xlu0.b32.cont [10/16] 0.0, 128
    %394 = vxpose.xlu0.b32.cont [11/16] 0.0, 128
    %395 = vxpose.xlu0.b32.cont [12/16] 0.0, 128
    %396 = vxpose.xlu0.b32.cont [13/16] 0.0, 128
    %397 = vxpose.xlu0.b32.cont [14/16] 0.0, 128
    %398 = vxpose.xlu0.b32.cont [15/16] 0.0, 128
    %399 = vxpose.xlu0.b32.end [16/16] 0.0, 128
    %v400 = vpop.trf.xlu0
    %v401 = vpop.trf.xlu0
    %v402 = vpop.trf.xlu0
    %v403 = vpop.trf.xlu0
    %v404 = vpop.trf.xlu0
    %v405 = vpop.trf.xlu0
    %v406 = vpop.trf.xlu0
    %v407 = vpop.trf.xlu0
    %v408 = vpop.trf.xlu0
    %v409 = vpop.trf.xlu0
    %v410 = vpop.trf.xlu0
    %v411 = vpop.trf.xlu0
    %v412 = vpop.trf.xlu0
    %v413 = vpop.trf.xlu0
    %v414 = vpop.trf.xlu0
    %v415 = vpop.trf.xlu0
    %416 = vxpose.xlu0.b32.start [1/16] %v179, 128
    %417 = vxpose.xlu0.b32.cont [2/16] 0.0, 128
    %418 = vxpose.xlu0.b32.cont [3/16] 0.0, 128
    %419 = vxpose.xlu0.b32.cont [4/16] 0.0, 128
    %420 = vxpose.xlu0.b32.cont [5/16] 0.0, 128
    %421 = vxpose.xlu0.b32.cont [6/16] 0.0, 128
    %422 = vxpose.xlu0.b32.cont [7/16] 0.0, 128
    %423 = vxpose.xlu0.b32.cont [8/16] 0.0, 128
    %424 = vxpose.xlu0.b32.cont [9/16] 0.0, 128
    %425 = vxpose.xlu0.b32.cont [10/16] 0.0, 128
    %426 = vxpose.xlu0.b32.cont [11/16] 0.0, 128
    %427 = vxpose.xlu0.b32.cont [12/16] 0.0, 128
    %428 = vxpose.xlu0.b32.cont [13/16] 0.0, 128
    %429 = vxpose.xlu0.b32.cont [14/16] 0.0, 128
    %430 = vxpose.xlu0.b32.cont [15/16] 0.0, 128
    %431 = vxpose.xlu0.b32.end [16/16] 0.0, 128
    %v432 = vpop.trf.xlu0
    %v433 = vpop.trf.xlu0
    %v434 = vpop.trf.xlu0
    %v435 = vpop.trf.xlu0
    %v436 = vpop.trf.xlu0
    %v437 = vpop.trf.xlu0
    %v438 = vpop.trf.xlu0
    %v439 = vpop.trf.xlu0
    %v440 = vpop.trf.xlu0
    %v441 = vpop.trf.xlu0
    %v442 = vpop.trf.xlu0
    %v443 = vpop.trf.xlu0
    %v444 = vpop.trf.xlu0
    %v445 = vpop.trf.xlu0
    %v446 = vpop.trf.xlu0
    %v447 = vpop.trf.xlu0
    %vm448 = vcmask 64512
    %v450 = vsel %vm448, %v208, 0
    %452 = vmatprep.subr.mxu0 0.0
    %453 = vmatpush1.msra.mxu0 0.0
    %454 = vmatprep.subr.mxu0 0.0
    %455 = vmatpush1.msra.mxu0 0.0
    %456 = vmatprep.subr.mxu0 0.0
    %457 = vmatpush1.msra.mxu0 0.0
    %458 = vmatprep.subr.mxu0 0.0
    %459 = vmatpush1.msra.mxu0 0.0
    %460 = vmatprep.subr.mxu0 0.0
    %461 = vmatpush1.msra.mxu0 0.0
    %462 = vmatprep.subr.mxu0 0.0
    %463 = vmatpush1.msra.mxu0 0.0
    %464 = vmatprep.subr.mxu0 0.0
    %465 = vmatpush1.msra.mxu0 0.0
    %466 = vmatprep.subr.mxu0 0.0
    %467 = vmatpush1.msra.mxu0 0.0
    %468 = vmatprep.subr.mxu0 0.0
    %469 = vmatpush1.msra.mxu0 0.0
    %470 = vmatprep.subr.mxu0 0.0
    %471 = vmatpush1.msra.mxu0 0.0
    %472 = vmatprep.subr.mxu0 0.0
    %473 = vmatpush1.msra.mxu0 0.0
    %474 = vmatprep.subr.mxu0 0.0
    %475 = vmatpush1.msra.mxu0 0.0
    %476 = vmatprep.subr.mxu0 0.0
    %477 = vmatpush1.msra.mxu0 0.0
    %478 = vmatprep.subr.mxu0 0.0
    %479 = vmatpush1.msra.mxu0 0.0
    %480 = vmatprep.subr.mxu0 0.0
    %481 = vmatpush1.msra.mxu0 0.0
    %482 = vmatprep.subr.mxu0 0.0
    %483 = vmatpush1.msra.mxu0 %v148
    %484 = vmatprep.subr.mxu0 0.0
    %485 = vmatpush2.msra.mxu0 0.0
    %486 = vmatprep.subr.mxu0 0.0
    %487 = vmatpush2.msra.mxu0 0.0
    %488 = vmatprep.subr.mxu0 0.0
    %489 = vmatpush2.msra.mxu0 0.0
    %490 = vmatprep.subr.mxu0 0.0
    %491 = vmatpush2.msra.mxu0 0.0
    %492 = vmatprep.subr.mxu0 0.0
    %493 = vmatpush2.msra.mxu0 0.0
    %494 = vmatprep.subr.mxu0 0.0
    %495 = vmatpush2.msra.mxu0 0.0
    %496 = vmatprep.subr.mxu0 0.0
    %497 = vmatpush2.msra.mxu0 0.0
    %498 = vmatprep.subr.mxu0 0.0
    %499 = vmatpush2.msra.mxu0 0.0
    %500 = vmatprep.subr.mxu0 0.0
    %501 = vmatpush2.msra.mxu0 0.0
    %502 = vmatprep.subr.mxu0 0.0
    %503 = vmatpush2.msra.mxu0 0.0
    %504 = vmatprep.subr.mxu0 0.0
    %505 = vmatpush2.msra.mxu0 0.0
    %506 = vmatprep.subr.mxu0 0.0
    %507 = vmatpush2.msra.mxu0 0.0
    %508 = vmatprep.subr.mxu0 0.0
    %509 = vmatpush2.msra.mxu0 0.0
    %510 = vmatprep.subr.mxu0 0.0
    %511 = vmatpush2.msra.mxu0 0.0
    %512 = vmatprep.subr.mxu0 0.0
    %513 = vmatpush2.msra.mxu0 0.0
    %514 = vmatprep.subr.mxu0 0.0
    %515 = vmatpush2.msra.mxu0 0.0
    %516 = vmatprep.mubr.f32.mxu0 0.0
    %517 = vmatmul.mubr.f32.gmra.mxu0 %v450
    %v518 = vpop.f32.mrf.mxu0
    %v519 = vadd.f32 0.0, %v518
    %v520 = vpop.f32.mrf.mxu0
    %521 = vdwg.mxu0
    %v523 = vsel %vm448, %v240, 0
    %525 = vmatprep.subr.mxu0 0.0
    %526 = vmatpush1.msra.mxu0 0.0
    %527 = vmatprep.subr.mxu0 0.0
    %528 = vmatpush1.msra.mxu0 0.0
    %529 = vmatprep.subr.mxu0 0.0
    %530 = vmatpush1.msra.mxu0 0.0
    %531 = vmatprep.subr.mxu0 0.0
    %532 = vmatpush1.msra.mxu0 0.0
    %533 = vmatprep.subr.mxu0 0.0
    %534 = vmatpush1.msra.mxu0 0.0
    %535 = vmatprep.subr.mxu0 0.0
    %536 = vmatpush1.msra.mxu0 0.0
    %537 = vmatprep.subr.mxu0 0.0
    %538 = vmatpush1.msra.mxu0 0.0
    %539 = vmatprep.subr.mxu0 0.0
    %540 = vmatpush1.msra.mxu0 0.0
    %541 = vmatprep.subr.mxu0 0.0
    %542 = vmatpush1.msra.mxu0 0.0
    %543 = vmatprep.subr.mxu0 0.0
    %544 = vmatpush1.msra.mxu0 0.0
    %545 = vmatprep.subr.mxu0 0.0
    %546 = vmatpush1.msra.mxu0 0.0
    %547 = vmatprep.subr.mxu0 0.0
    %548 = vmatpush1.msra.mxu0 0.0
    %549 = vmatprep.subr.mxu0 0.0
    %550 = vmatpush1.msra.mxu0 0.0
    %551 = vmatprep.subr.mxu0 0.0
    %552 = vmatpush1.msra.mxu0 0.0
    %553 = vmatprep.subr.mxu0 0.0
    %554 = vmatpush1.msra.mxu0 0.0
    %555 = vmatprep.subr.mxu0 0.0
    %556 = vmatpush1.msra.mxu0 %v149
    %557 = vmatprep.subr.mxu0 0.0
    %558 = vmatpush2.msra.mxu0 0.0
    %559 = vmatprep.subr.mxu0 0.0
    %560 = vmatpush2.msra.mxu0 0.0
    %561 = vmatprep.subr.mxu0 0.0
    %562 = vmatpush2.msra.mxu0 0.0
    %563 = vmatprep.subr.mxu0 0.0
    %564 = vmatpush2.msra.mxu0 0.0
    %565 = vmatprep.subr.mxu0 0.0
    %566 = vmatpush2.msra.mxu0 0.0
    %567 = vmatprep.subr.mxu0 0.0
    %568 = vmatpush2.msra.mxu0 0.0
    %569 = vmatprep.subr.mxu0 0.0
    %570 = vmatpush2.msra.mxu0 0.0
    %571 = vmatprep.subr.mxu0 0.0
    %572 = vmatpush2.msra.mxu0 0.0
    %573 = vmatprep.subr.mxu0 0.0
    %574 = vmatpush2.msra.mxu0 0.0
    %575 = vmatprep.subr.mxu0 0.0
    %576 = vmatpush2.msra.mxu0 0.0
    %577 = vmatprep.subr.mxu0 0.0
    %578 = vmatpush2.msra.mxu0 0.0
    %579 = vmatprep.subr.mxu0 0.0
    %580 = vmatpush2.msra.mxu0 0.0
    %581 = vmatprep.subr.mxu0 0.0
    %582 = vmatpush2.msra.mxu0 0.0
    %583 = vmatprep.subr.mxu0 0.0
    %584 = vmatpush2.msra.mxu0 0.0
    %585 = vmatprep.subr.mxu0 0.0
    %586 = vmatpush2.msra.mxu0 0.0
    %587 = vmatprep.subr.mxu0 0.0
    %588 = vmatpush2.msra.mxu0 0.0
    %589 = vmatprep.mubr.f32.mxu0 0.0
    %590 = vmatmul.mubr.f32.gmra.mxu0 %v523
    %v591 = vpop.f32.mrf.mxu0
    %v592 = vadd.f32 0.0, %v591
    %v593 = vpop.f32.mrf.mxu0
    %594 = vdwg.mxu0
    %v596 = vsel %vm448, %v272, 0
    %598 = vmatprep.subr.mxu0 0.0
    %599 = vmatpush1.msra.mxu0 0.0
    %600 = vmatprep.subr.mxu0 0.0
    %601 = vmatpush1.msra.mxu0 0.0
    %602 = vmatprep.subr.mxu0 0.0
    %603 = vmatpush1.msra.mxu0 0.0
    %604 = vmatprep.subr.mxu0 0.0
    %605 = vmatpush1.msra.mxu0 0.0
    %606 = vmatprep.subr.mxu0 0.0
    %607 = vmatpush1.msra.mxu0 0.0
    %608 = vmatprep.subr.mxu0 0.0
    %609 = vmatpush1.msra.mxu0 0.0
    %610 = vmatprep.subr.mxu0 0.0
    %611 = vmatpush1.msra.mxu0 0.0
    %612 = vmatprep.subr.mxu0 0.0
    %613 = vmatpush1.msra.mxu0 0.0
    %614 = vmatprep.subr.mxu0 0.0
    %615 = vmatpush1.msra.mxu0 0.0
    %616 = vmatprep.subr.mxu0 0.0
    %617 = vmatpush1.msra.mxu0 0.0
    %618 = vmatprep.subr.mxu0 0.0
    %619 = vmatpush1.msra.mxu0 0.0
    %620 = vmatprep.subr.mxu0 0.0
    %621 = vmatpush1.msra.mxu0 0.0
    %622 = vmatprep.subr.mxu0 0.0
    %623 = vmatpush1.msra.mxu0 0.0
    %624 = vmatprep.subr.mxu0 0.0
    %625 = vmatpush1.msra.mxu0 0.0
    %626 = vmatprep.subr.mxu0 0.0
    %627 = vmatpush1.msra.mxu0 0.0
    %628 = vmatprep.subr.mxu0 0.0
    %629 = vmatpush1.msra.mxu0 %v150
    %630 = vmatprep.subr.mxu0 0.0
    %631 = vmatpush2.msra.mxu0 0.0
    %632 = vmatprep.subr.mxu0 0.0
    %633 = vmatpush2.msra.mxu0 0.0
    %634 = vmatprep.subr.mxu0 0.0
    %635 = vmatpush2.msra.mxu0 0.0
    %636 = vmatprep.subr.mxu0 0.0
    %637 = vmatpush2.msra.mxu0 0.0
    %638 = vmatprep.subr.mxu0 0.0
    %639 = vmatpush2.msra.mxu0 0.0
    %640 = vmatprep.subr.mxu0 0.0
    %641 = vmatpush2.msra.mxu0 0.0
    %642 = vmatprep.subr.mxu0 0.0
    %643 = vmatpush2.msra.mxu0 0.0
    %644 = vmatprep.subr.mxu0 0.0
    %645 = vmatpush2.msra.mxu0 0.0
    %646 = vmatprep.subr.mxu0 0.0
    %647 = vmatpush2.msra.mxu0 0.0
    %648 = vmatprep.subr.mxu0 0.0
    %649 = vmatpush2.msra.mxu0 0.0
    %650 = vmatprep.subr.mxu0 0.0
    %651 = vmatpush2.msra.mxu0 0.0
    %652 = vmatprep.subr.mxu0 0.0
    %653 = vmatpush2.msra.mxu0 0.0
    %654 = vmatprep.subr.mxu0 0.0
    %655 = vmatpush2.msra.mxu0 0.0
    %656 = vmatprep.subr.mxu0 0.0
    %657 = vmatpush2.msra.mxu0 0.0
    %658 = vmatprep.subr.mxu0 0.0
    %659 = vmatpush2.msra.mxu0 0.0
    %660 = vmatprep.subr.mxu0 0.0
    %661 = vmatpush2.msra.mxu0 0.0
    %662 = vmatprep.mubr.f32.mxu0 0.0
    %663 = vmatmul.mubr.f32.gmra.mxu0 %v596
    %v664 = vpop.f32.mrf.mxu0
    %v665 = vadd.f32 0.0, %v664
    %v666 = vpop.f32.mrf.mxu0
    %667 = vdwg.mxu0
    %v669 = vsel %vm448, %v304, 0
    %671 = vmatprep.subr.mxu0 0.0
    %672 = vmatpush1.msra.mxu0 0.0
    %673 = vmatprep.subr.mxu0 0.0
    %674 = vmatpush1.msra.mxu0 0.0
    %675 = vmatprep.subr.mxu0 0.0
    %676 = vmatpush1.msra.mxu0 0.0
    %677 = vmatprep.subr.mxu0 0.0
    %678 = vmatpush1.msra.mxu0 0.0
    %679 = vmatprep.subr.mxu0 0.0
    %680 = vmatpush1.msra.mxu0 0.0
    %681 = vmatprep.subr.mxu0 0.0
    %682 = vmatpush1.msra.mxu0 0.0
    %683 = vmatprep.subr.mxu0 0.0
    %684 = vmatpush1.msra.mxu0 0.0
    %685 = vmatprep.subr.mxu0 0.0
    %686 = vmatpush1.msra.mxu0 0.0
    %687 = vmatprep.subr.mxu0 0.0
    %688 = vmatpush1.msra.mxu0 0.0
    %689 = vmatprep.subr.mxu0 0.0
    %690 = vmatpush1.msra.mxu0 0.0
    %691 = vmatprep.subr.mxu0 0.0
    %692 = vmatpush1.msra.mxu0 0.0
    %693 = vmatprep.subr.mxu0 0.0
    %694 = vmatpush1.msra.mxu0 0.0
    %695 = vmatprep.subr.mxu0 0.0
    %696 = vmatpush1.msra.mxu0 0.0
    %697 = vmatprep.subr.mxu0 0.0
    %698 = vmatpush1.msra.mxu0 0.0
    %699 = vmatprep.subr.mxu0 0.0
    %700 = vmatpush1.msra.mxu0 0.0
    %701 = vmatprep.subr.mxu0 0.0
    %702 = vmatpush1.msra.mxu0 %v151
    %703 = vmatprep.subr.mxu0 0.0
    %704 = vmatpush2.msra.mxu0 0.0
    %705 = vmatprep.subr.mxu0 0.0
    %706 = vmatpush2.msra.mxu0 0.0
    %707 = vmatprep.subr.mxu0 0.0
    %708 = vmatpush2.msra.mxu0 0.0
    %709 = vmatprep.subr.mxu0 0.0
    %710 = vmatpush2.msra.mxu0 0.0
    %711 = vmatprep.subr.mxu0 0.0
    %712 = vmatpush2.msra.mxu0 0.0
    %713 = vmatprep.subr.mxu0 0.0
    %714 = vmatpush2.msra.mxu0 0.0
    %715 = vmatprep.subr.mxu0 0.0
    %716 = vmatpush2.msra.mxu0 0.0
    %717 = vmatprep.subr.mxu0 0.0
    %718 = vmatpush2.msra.mxu0 0.0
    %719 = vmatprep.subr.mxu0 0.0
    %720 = vmatpush2.msra.mxu0 0.0
    %721 = vmatprep.subr.mxu0 0.0
    %722 = vmatpush2.msra.mxu0 0.0
    %723 = vmatprep.subr.mxu0 0.0
    %724 = vmatpush2.msra.mxu0 0.0
    %725 = vmatprep.subr.mxu0 0.0
    %726 = vmatpush2.msra.mxu0 0.0
    %727 = vmatprep.subr.mxu0 0.0
    %728 = vmatpush2.msra.mxu0 0.0
    %729 = vmatprep.subr.mxu0 0.0
    %730 = vmatpush2.msra.mxu0 0.0
    %731 = vmatprep.subr.mxu0 0.0
    %732 = vmatpush2.msra.mxu0 0.0
    %733 = vmatprep.subr.mxu0 0.0
    %734 = vmatpush2.msra.mxu0 0.0
    %735 = vmatprep.mubr.f32.mxu0 0.0
    %736 = vmatmul.mubr.f32.gmra.mxu0 %v669
    %v737 = vpop.f32.mrf.mxu0
    %v738 = vadd.f32 0.0, %v737
    %v739 = vpop.f32.mrf.mxu0
    %740 = vdwg.mxu0
    %v742 = vsel %vm448, %v336, 0
    %744 = vmatprep.subr.mxu0 0.0
    %745 = vmatpush1.msra.mxu0 0.0
    %746 = vmatprep.subr.mxu0 0.0
    %747 = vmatpush1.msra.mxu0 0.0
    %748 = vmatprep.subr.mxu0 0.0
    %749 = vmatpush1.msra.mxu0 0.0
    %750 = vmatprep.subr.mxu0 0.0
    %751 = vmatpush1.msra.mxu0 0.0
    %752 = vmatprep.subr.mxu0 0.0
    %753 = vmatpush1.msra.mxu0 0.0
    %754 = vmatprep.subr.mxu0 0.0
    %755 = vmatpush1.msra.mxu0 0.0
    %756 = vmatprep.subr.mxu0 0.0
    %757 = vmatpush1.msra.mxu0 0.0
    %758 = vmatprep.subr.mxu0 0.0
    %759 = vmatpush1.msra.mxu0 0.0
    %760 = vmatprep.subr.mxu0 0.0
    %761 = vmatpush1.msra.mxu0 0.0
    %762 = vmatprep.subr.mxu0 0.0
    %763 = vmatpush1.msra.mxu0 0.0
    %764 = vmatprep.subr.mxu0 0.0
    %765 = vmatpush1.msra.mxu0 0.0
    %766 = vmatprep.subr.mxu0 0.0
    %767 = vmatpush1.msra.mxu0 0.0
    %768 = vmatprep.subr.mxu0 0.0
    %769 = vmatpush1.msra.mxu0 0.0
    %770 = vmatprep.subr.mxu0 0.0
    %771 = vmatpush1.msra.mxu0 0.0
    %772 = vmatprep.subr.mxu0 0.0
    %773 = vmatpush1.msra.mxu0 0.0
    %774 = vmatprep.subr.mxu0 0.0
    %775 = vmatpush1.msra.mxu0 %v180
    %776 = vmatprep.subr.mxu0 0.0
    %777 = vmatpush2.msra.mxu0 0.0
    %778 = vmatprep.subr.mxu0 0.0
    %779 = vmatpush2.msra.mxu0 0.0
    %780 = vmatprep.subr.mxu0 0.0
    %781 = vmatpush2.msra.mxu0 0.0
    %782 = vmatprep.subr.mxu0 0.0
    %783 = vmatpush2.msra.mxu0 0.0
    %784 = vmatprep.subr.mxu0 0.0
    %785 = vmatpush2.msra.mxu0 0.0
    %786 = vmatprep.subr.mxu0 0.0
    %787 = vmatpush2.msra.mxu0 0.0
    %788 = vmatprep.subr.mxu0 0.0
    %789 = vmatpush2.msra.mxu0 0.0
    %790 = vmatprep.subr.mxu0 0.0
    %791 = vmatpush2.msra.mxu0 0.0
    %792 = vmatprep.subr.mxu0 0.0
    %793 = vmatpush2.msra.mxu0 0.0
    %794 = vmatprep.subr.mxu0 0.0
    %795 = vmatpush2.msra.mxu0 0.0
    %796 = vmatprep.subr.mxu0 0.0
    %797 = vmatpush2.msra.mxu0 0.0
    %798 = vmatprep.subr.mxu0 0.0
    %799 = vmatpush2.msra.mxu0 0.0
    %800 = vmatprep.subr.mxu0 0.0
    %801 = vmatpush2.msra.mxu0 0.0
    %802 = vmatprep.subr.mxu0 0.0
    %803 = vmatpush2.msra.mxu0 0.0
    %804 = vmatprep.subr.mxu0 0.0
    %805 = vmatpush2.msra.mxu0 0.0
    %806 = vmatprep.subr.mxu0 0.0
    %807 = vmatpush2.msra.mxu0 0.0
    %808 = vmatprep.mubr.f32.mxu0 0.0
    %809 = vmatmul.mubr.f32.gmra.mxu0 %v742
    %v810 = vpop.f32.mrf.mxu0
    %v811 = vadd.f32 0.0, %v810
    %v812 = vpop.f32.mrf.mxu0
    %813 = vdwg.mxu0
    %v815 = vsel %vm448, %v368, 0
    %817 = vmatprep.subr.mxu0 0.0
    %818 = vmatpush1.msra.mxu0 0.0
    %819 = vmatprep.subr.mxu0 0.0
    %820 = vmatpush1.msra.mxu0 0.0
    %821 = vmatprep.subr.mxu0 0.0
    %822 = vmatpush1.msra.mxu0 0.0
    %823 = vmatprep.subr.mxu0 0.0
    %824 = vmatpush1.msra.mxu0 0.0
    %825 = vmatprep.subr.mxu0 0.0
    %826 = vmatpush1.msra.mxu0 0.0
    %827 = vmatprep.subr.mxu0 0.0
    %828 = vmatpush1.msra.mxu0 0.0
    %829 = vmatprep.subr.mxu0 0.0
    %830 = vmatpush1.msra.mxu0 0.0
    %831 = vmatprep.subr.mxu0 0.0
    %832 = vmatpush1.msra.mxu0 0.0
    %833 = vmatprep.subr.mxu0 0.0
    %834 = vmatpush1.msra.mxu0 0.0
    %835 = vmatprep.subr.mxu0 0.0
    %836 = vmatpush1.msra.mxu0 0.0
    %837 = vmatprep.subr.mxu0 0.0
    %838 = vmatpush1.msra.mxu0 0.0
    %839 = vmatprep.subr.mxu0 0.0
    %840 = vmatpush1.msra.mxu0 0.0
    %841 = vmatprep.subr.mxu0 0.0
    %842 = vmatpush1.msra.mxu0 0.0
    %843 = vmatprep.subr.mxu0 0.0
    %844 = vmatpush1.msra.mxu0 0.0
    %845 = vmatprep.subr.mxu0 0.0
    %846 = vmatpush1.msra.mxu0 0.0
    %847 = vmatprep.subr.mxu0 0.0
    %848 = vmatpush1.msra.mxu0 %v181
    %849 = vmatprep.subr.mxu0 0.0
    %850 = vmatpush2.msra.mxu0 0.0
    %851 = vmatprep.subr.mxu0 0.0
    %852 = vmatpush2.msra.mxu0 0.0
    %853 = vmatprep.subr.mxu0 0.0
    %854 = vmatpush2.msra.mxu0 0.0
    %855 = vmatprep.subr.mxu0 0.0
    %856 = vmatpush2.msra.mxu0 0.0
    %857 = vmatprep.subr.mxu0 0.0
    %858 = vmatpush2.msra.mxu0 0.0
    %859 = vmatprep.subr.mxu0 0.0
    %860 = vmatpush2.msra.mxu0 0.0
    %861 = vmatprep.subr.mxu0 0.0
    %862 = vmatpush2.msra.mxu0 0.0
    %863 = vmatprep.subr.mxu0 0.0
    %864 = vmatpush2.msra.mxu0 0.0
    %865 = vmatprep.subr.mxu0 0.0
    %866 = vmatpush2.msra.mxu0 0.0
    %867 = vmatprep.subr.mxu0 0.0
    %868 = vmatpush2.msra.mxu0 0.0
    %869 = vmatprep.subr.mxu0 0.0
    %870 = vmatpush2.msra.mxu0 0.0
    %871 = vmatprep.subr.mxu0 0.0
    %872 = vmatpush2.msra.mxu0 0.0
    %873 = vmatprep.subr.mxu0 0.0
    %874 = vmatpush2.msra.mxu0 0.0
    %875 = vmatprep.subr.mxu0 0.0
    %876 = vmatpush2.msra.mxu0 0.0
    %877 = vmatprep.subr.mxu0 0.0
    %878 = vmatpush2.msra.mxu0 0.0
    %879 = vmatprep.subr.mxu0 0.0
    %880 = vmatpush2.msra.mxu0 0.0
    %881 = vmatprep.mubr.f32.mxu0 0.0
    %882 = vmatmul.mubr.f32.gmra.mxu0 %v815
    %v883 = vpop.f32.mrf.mxu0
    %v884 = vadd.f32 0.0, %v883
    %v885 = vpop.f32.mrf.mxu0
    %886 = vdwg.mxu0
    %v888 = vsel %vm448, %v400, 0
    %890 = vmatprep.subr.mxu0 0.0
    %891 = vmatpush1.msra.mxu0 0.0
    %892 = vmatprep.subr.mxu0 0.0
    %893 = vmatpush1.msra.mxu0 0.0
    %894 = vmatprep.subr.mxu0 0.0
    %895 = vmatpush1.msra.mxu0 0.0
    %896 = vmatprep.subr.mxu0 0.0
    %897 = vmatpush1.msra.mxu0 0.0
    %898 = vmatprep.subr.mxu0 0.0
    %899 = vmatpush1.msra.mxu0 0.0
    %900 = vmatprep.subr.mxu0 0.0
    %901 = vmatpush1.msra.mxu0 0.0
    %902 = vmatprep.subr.mxu0 0.0
    %903 = vmatpush1.msra.mxu0 0.0
    %904 = vmatprep.subr.mxu0 0.0
    %905 = vmatpush1.msra.mxu0 0.0
    %906 = vmatprep.subr.mxu0 0.0
    %907 = vmatpush1.msra.mxu0 0.0
    %908 = vmatprep.subr.mxu0 0.0
    %909 = vmatpush1.msra.mxu0 0.0
    %910 = vmatprep.subr.mxu0 0.0
    %911 = vmatpush1.msra.mxu0 0.0
    %912 = vmatprep.subr.mxu0 0.0
    %913 = vmatpush1.msra.mxu0 0.0
    %914 = vmatprep.subr.mxu0 0.0
    %915 = vmatpush1.msra.mxu0 0.0
    %916 = vmatprep.subr.mxu0 0.0
    %917 = vmatpush1.msra.mxu0 0.0
    %918 = vmatprep.subr.mxu0 0.0
    %919 = vmatpush1.msra.mxu0 0.0
    %920 = vmatprep.subr.mxu0 0.0
    %921 = vmatpush1.msra.mxu0 %v182
    %922 = vmatprep.subr.mxu0 0.0
    %923 = vmatpush2.msra.mxu0 0.0
    %924 = vmatprep.subr.mxu0 0.0
    %925 = vmatpush2.msra.mxu0 0.0
    %926 = vmatprep.subr.mxu0 0.0
    %927 = vmatpush2.msra.mxu0 0.0
    %928 = vmatprep.subr.mxu0 0.0
    %929 = vmatpush2.msra.mxu0 0.0
    %930 = vmatprep.subr.mxu0 0.0
    %931 = vmatpush2.msra.mxu0 0.0
    %932 = vmatprep.subr.mxu0 0.0
    %933 = vmatpush2.msra.mxu0 0.0
    %934 = vmatprep.subr.mxu0 0.0
    %935 = vmatpush2.msra.mxu0 0.0
    %936 = vmatprep.subr.mxu0 0.0
    %937 = vmatpush2.msra.mxu0 0.0
    %938 = vmatprep.subr.mxu0 0.0
    %939 = vmatpush2.msra.mxu0 0.0
    %940 = vmatprep.subr.mxu0 0.0
    %941 = vmatpush2.msra.mxu0 0.0
    %942 = vmatprep.subr.mxu0 0.0
    %943 = vmatpush2.msra.mxu0 0.0
    %944 = vmatprep.subr.mxu0 0.0
    %945 = vmatpush2.msra.mxu0 0.0
    %946 = vmatprep.subr.mxu0 0.0
    %947 = vmatpush2.msra.mxu0 0.0
    %948 = vmatprep.subr.mxu0 0.0
    %949 = vmatpush2.msra.mxu0 0.0
    %950 = vmatprep.subr.mxu0 0.0
    %951 = vmatpush2.msra.mxu0 0.0
    %952 = vmatprep.subr.mxu0 0.0
    %953 = vmatpush2.msra.mxu0 0.0
    %954 = vmatprep.mubr.f32.mxu0 0.0
    %955 = vmatmul.mubr.f32.gmra.mxu0 %v888
    %v956 = vpop.f32.mrf.mxu0
    %v957 = vadd.f32 0.0, %v956
    %v958 = vpop.f32.mrf.mxu0
    %959 = vdwg.mxu0
    %v961 = vsel %vm448, %v432, 0
    %963 = vmatprep.subr.mxu0 0.0
    %964 = vmatpush1.msra.mxu0 0.0
    %965 = vmatprep.subr.mxu0 0.0
    %966 = vmatpush1.msra.mxu0 0.0
    %967 = vmatprep.subr.mxu0 0.0
    %968 = vmatpush1.msra.mxu0 0.0
    %969 = vmatprep.subr.mxu0 0.0
    %970 = vmatpush1.msra.mxu0 0.0
    %971 = vmatprep.subr.mxu0 0.0
    %972 = vmatpush1.msra.mxu0 0.0
    %973 = vmatprep.subr.mxu0 0.0
    %974 = vmatpush1.msra.mxu0 0.0
    %975 = vmatprep.subr.mxu0 0.0
    %976 = vmatpush1.msra.mxu0 0.0
    %977 = vmatprep.subr.mxu0 0.0
    %978 = vmatpush1.msra.mxu0 0.0
    %979 = vmatprep.subr.mxu0 0.0
    %980 = vmatpush1.msra.mxu0 0.0
    %981 = vmatprep.subr.mxu0 0.0
    %982 = vmatpush1.msra.mxu0 0.0
    %983 = vmatprep.subr.mxu0 0.0
    %984 = vmatpush1.msra.mxu0 0.0
    %985 = vmatprep.subr.mxu0 0.0
    %986 = vmatpush1.msra.mxu0 0.0
    %987 = vmatprep.subr.mxu0 0.0
    %988 = vmatpush1.msra.mxu0 0.0
    %989 = vmatprep.subr.mxu0 0.0
    %990 = vmatpush1.msra.mxu0 0.0
    %991 = vmatprep.subr.mxu0 0.0
    %992 = vmatpush1.msra.mxu0 0.0
    %993 = vmatprep.subr.mxu0 0.0
    %994 = vmatpush1.msra.mxu0 %v183
    %995 = vmatprep.subr.mxu0 0.0
    %996 = vmatpush2.msra.mxu0 0.0
    %997 = vmatprep.subr.mxu0 0.0
    %998 = vmatpush2.msra.mxu0 0.0
    %999 = vmatprep.subr.mxu0 0.0
    %1000 = vmatpush2.msra.mxu0 0.0
    %1001 = vmatprep.subr.mxu0 0.0
    %1002 = vmatpush2.msra.mxu0 0.0
    %1003 = vmatprep.subr.mxu0 0.0
    %1004 = vmatpush2.msra.mxu0 0.0
    %1005 = vmatprep.subr.mxu0 0.0
    %1006 = vmatpush2.msra.mxu0 0.0
    %1007 = vmatprep.subr.mxu0 0.0
    %1008 = vmatpush2.msra.mxu0 0.0
    %1009 = vmatprep.subr.mxu0 0.0
    %1010 = vmatpush2.msra.mxu0 0.0
    %1011 = vmatprep.subr.mxu0 0.0
    %1012 = vmatpush2.msra.mxu0 0.0
    %1013 = vmatprep.subr.mxu0 0.0
    %1014 = vmatpush2.msra.mxu0 0.0
    %1015 = vmatprep.subr.mxu0 0.0
    %1016 = vmatpush2.msra.mxu0 0.0
    %1017 = vmatprep.subr.mxu0 0.0
    %1018 = vmatpush2.msra.mxu0 0.0
    %1019 = vmatprep.subr.mxu0 0.0
    %1020 = vmatpush2.msra.mxu0 0.0
    %1021 = vmatprep.subr.mxu0 0.0
    %1022 = vmatpush2.msra.mxu0 0.0
    %1023 = vmatprep.subr.mxu0 0.0
    %1024 = vmatpush2.msra.mxu0 0.0
    %1025 = vmatprep.subr.mxu0 0.0
    %1026 = vmatpush2.msra.mxu0 0.0
    %1027 = vmatprep.mubr.f32.mxu0 0.0
    %1028 = vmatmul.mubr.f32.gmra.mxu0 %v961
    %v1029 = vpop.f32.mrf.mxu0
    %v1030 = vadd.f32 0.0, %v1029
    %v1031 = vpop.f32.mrf.mxu0
    %1032 = vdwg.mxu0
    %v1033 = vlaneseq
    %v1034 = vshrl.u32 %v1033, 7
    %v1035 = vlaneseq
    %v1036 = vand.u32 %v1035, 127
    %vm1037 = vcmp.le.s32.totalorder %v1036, %v1034
    %v1038 = vsel %vm1037, 1, 0
    %vm1039 = vcmp.eq.s32.totalorder %v1038, 1
    %v1040 = vsel %vm1039, %v519, -inf
    %v1041 = vsel %vm1039, %v592, -inf
    %v1042 = vsel %vm1039, %v665, -inf
    %v1043 = vsel %vm1039, %v738, -inf
    %v1044 = vsel %vm1039, %v811, -inf
    %v1045 = vsel %vm1039, %v884, -inf
    %v1046 = vsel %vm1039, %v957, -inf
    %v1047 = vsel %vm1039, %v1030, -inf
    %v1048 = vsel %vm448, %v1040, -inf
    %1049 = vmax.xlane.f32.xlu0 %v1048
    %v1050 = vpop.xlane.xlu0 %1049
    %v1051 = vsel %vm448, %v1041, -inf
    %1052 = vmax.xlane.f32.xlu0 %v1051
    %v1053 = vpop.xlane.xlu0 %1052
    %v1054 = vsel %vm448, %v1042, -inf
    %1055 = vmax.xlane.f32.xlu0 %v1054
    %v1056 = vpop.xlane.xlu0 %1055
    %v1057 = vsel %vm448, %v1043, -inf
    %1058 = vmax.xlane.f32.xlu0 %v1057
    %v1059 = vpop.xlane.xlu0 %1058
    %v1060 = vsel %vm448, %v1044, -inf
    %1061 = vmax.xlane.f32.xlu0 %v1060
    %v1062 = vpop.xlane.xlu0 %1061
    %v1063 = vsel %vm448, %v1045, -inf
    %1064 = vmax.xlane.f32.xlu0 %v1063
    %v1065 = vpop.xlane.xlu0 %1064
    %v1066 = vsel %vm448, %v1046, -inf
    %1067 = vmax.xlane.f32.xlu0 %v1066
    %v1068 = vpop.xlane.xlu0 %1067
    %v1069 = vsel %vm448, %v1047, -inf
    %1070 = vmax.xlane.f32.xlu0 %v1069
    %v1071 = vpop.xlane.xlu0 %1070
    %v1072 = vsub.f32 %v1040, %v1050
    %v1073 = vsub.f32 %v1041, %v1053
    %v1074 = vsub.f32 %v1042, %v1056
    %v1075 = vsub.f32 %v1043, %v1059
    %v1076 = vsub.f32 %v1044, %v1062
    %v1077 = vsub.f32 %v1045, %v1065
    %v1078 = vsub.f32 %v1046, %v1068
    %v1079 = vsub.f32 %v1047, %v1071
    %v1080 = vmul.f32 %v1072, 1.442695
    %v1081 = vpow.pop %v1080
    %v1082 = vmul.f32 %v1073, 1.442695
    %v1083 = vpow.pop %v1082
    %v1084 = vmul.f32 %v1074, 1.442695
    %v1085 = vpow.pop %v1084
    %v1086 = vmul.f32 %v1075, 1.442695
    %v1087 = vpow.pop %v1086
    %v1088 = vmul.f32 %v1076, 1.442695
    %v1089 = vpow.pop %v1088
    %v1090 = vmul.f32 %v1077, 1.442695
    %v1091 = vpow.pop %v1090
    %v1092 = vmul.f32 %v1078, 1.442695
    %v1093 = vpow.pop %v1092
    %v1094 = vmul.f32 %v1079, 1.442695
    %v1095 = vpow.pop %v1094
    %v1096 = vsel %vm448, %v1081, 0.0
    %1097 = vadd.xlane.f32.xlu0 %v1096
    %v1098 = vpop.xlane.xlu0 %1097
    %v1099 = vsel %vm448, %v1083, 0.0
    %1100 = vadd.xlane.f32.xlu0 %v1099
    %v1101 = vpop.xlane.xlu0 %1100
    %v1102 = vsel %vm448, %v1085, 0.0
    %1103 = vadd.xlane.f32.xlu0 %v1102
    %v1104 = vpop.xlane.xlu0 %1103
    %v1105 = vsel %vm448, %v1087, 0.0
    %1106 = vadd.xlane.f32.xlu0 %v1105
    %v1107 = vpop.xlane.xlu0 %1106
    %v1108 = vsel %vm448, %v1089, 0.0
    %1109 = vadd.xlane.f32.xlu0 %v1108
    %v1110 = vpop.xlane.xlu0 %1109
    %v1111 = vsel %vm448, %v1091, 0.0
    %1112 = vadd.xlane.f32.xlu0 %v1111
    %v1113 = vpop.xlane.xlu0 %1112
    %v1114 = vsel %vm448, %v1093, 0.0
    %1115 = vadd.xlane.f32.xlu0 %v1114
    %v1116 = vpop.xlane.xlu0 %1115
    %v1117 = vsel %vm448, %v1095, 0.0
    %1118 = vadd.xlane.f32.xlu0 %v1117
    %v1119 = vpop.xlane.xlu0 %1118
    %v1120 = vrcp.pop %v1098
    %v1121 = vrcp.pop %v1101
    %v1122 = vrcp.pop %v1104
    %v1123 = vrcp.pop %v1107
    %v1124 = vrcp.pop %v1110
    %v1125 = vrcp.pop %v1113
    %v1126 = vrcp.pop %v1116
    %v1127 = vrcp.pop %v1119
    %v1128 = vmul.f32 %v1081, %v1120
    %v1129 = vmul.f32 %v1083, %v1121
    %v1130 = vmul.f32 %v1085, %v1122
    %v1131 = vmul.f32 %v1087, %v1123
    %v1132 = vmul.f32 %v1089, %v1124
    %v1133 = vmul.f32 %v1091, %v1125
    %v1134 = vmul.f32 %v1093, %v1126
    %v1135 = vmul.f32 %v1095, %v1127
    %v1137 = vsel %vm448, %v152, 0
    %v1140 = vsel %vm448, %v1128, 0
    %1142 = vmatprep.subr.mxu0 0.0
    %1143 = vmatpush1.xpose.msra.mxu0 0.0
    %1144 = vmatprep.subr.mxu0 0.0
    %1145 = vmatpush1.xpose.msra.mxu0 0.0
    %1146 = vmatprep.subr.mxu0 0.0
    %1147 = vmatpush1.xpose.msra.mxu0 0.0
    %1148 = vmatprep.subr.mxu0 0.0
    %1149 = vmatpush1.xpose.msra.mxu0 0.0
    %1150 = vmatprep.subr.mxu0 0.0
    %1151 = vmatpush1.xpose.msra.mxu0 0.0
    %1152 = vmatprep.subr.mxu0 0.0
    %1153 = vmatpush1.xpose.msra.mxu0 0.0
    %1154 = vmatprep.subr.mxu0 0.0
    %1155 = vmatpush1.xpose.msra.mxu0 0.0
    %1156 = vmatprep.subr.mxu0 0.0
    %1157 = vmatpush1.xpose.msra.mxu0 0.0
    %1158 = vmatprep.subr.mxu0 0.0
    %1159 = vmatpush1.xpose.msra.mxu0 0.0
    %1160 = vmatprep.subr.mxu0 0.0
    %1161 = vmatpush1.xpose.msra.mxu0 0.0
    %1162 = vmatprep.subr.mxu0 0.0
    %1163 = vmatpush1.xpose.msra.mxu0 0.0
    %1164 = vmatprep.subr.mxu0 0.0
    %1165 = vmatpush1.xpose.msra.mxu0 0.0
    %1166 = vmatprep.subr.mxu0 0.0
    %1167 = vmatpush1.xpose.msra.mxu0 0.0
    %1168 = vmatprep.subr.mxu0 0.0
    %1169 = vmatpush1.xpose.msra.mxu0 0.0
    %1170 = vmatprep.subr.mxu0 0.0
    %1171 = vmatpush1.xpose.msra.mxu0 0.0
    %1172 = vmatprep.subr.mxu0 0.0
    %1173 = vmatpush1.xpose.msra.mxu0 %v1140
    %1174 = vmatprep.subr.mxu0 0.0
    %1175 = vmatpush2.xpose.msra.mxu0 0.0
    %1176 = vmatprep.subr.mxu0 0.0
    %1177 = vmatpush2.xpose.msra.mxu0 0.0
    %1178 = vmatprep.subr.mxu0 0.0
    %1179 = vmatpush2.xpose.msra.mxu0 0.0
    %1180 = vmatprep.subr.mxu0 0.0
    %1181 = vmatpush2.xpose.msra.mxu0 0.0
    %1182 = vmatprep.subr.mxu0 0.0
    %1183 = vmatpush2.xpose.msra.mxu0 0.0
    %1184 = vmatprep.subr.mxu0 0.0
    %1185 = vmatpush2.xpose.msra.mxu0 0.0
    %1186 = vmatprep.subr.mxu0 0.0
    %1187 = vmatpush2.xpose.msra.mxu0 0.0
    %1188 = vmatprep.subr.mxu0 0.0
    %1189 = vmatpush2.xpose.msra.mxu0 0.0
    %1190 = vmatprep.subr.mxu0 0.0
    %1191 = vmatpush2.xpose.msra.mxu0 0.0
    %1192 = vmatprep.subr.mxu0 0.0
    %1193 = vmatpush2.xpose.msra.mxu0 0.0
    %1194 = vmatprep.subr.mxu0 0.0
    %1195 = vmatpush2.xpose.msra.mxu0 0.0
    %1196 = vmatprep.subr.mxu0 0.0
    %1197 = vmatpush2.xpose.msra.mxu0 0.0
    %1198 = vmatprep.subr.mxu0 0.0
    %1199 = vmatpush2.xpose.msra.mxu0 0.0
    %1200 = vmatprep.subr.mxu0 0.0
    %1201 = vmatpush2.xpose.msra.mxu0 0.0
    %1202 = vmatprep.subr.mxu0 0.0
    %1203 = vmatpush2.xpose.msra.mxu0 0.0
    %1204 = vmatprep.subr.mxu0 0.0
    %1205 = vmatpush2.xpose.msra.mxu0 0.0
    %1206 = vmatprep.mubr.f32.mxu0 0.0
    %1207 = vmatmul.mubr.f32.gmra.mxu0 %v1137
    %v1208 = vpop.f32.mrf.mxu0
    %v1209 = vadd.f32 0.0, %v1208
    %v1210 = vpop.f32.mrf.mxu0
    %1211 = vdwg.mxu0
    %v1213 = vsel %vm448, %v153, 0
    %v1216 = vsel %vm448, %v1129, 0
    %1218 = vmatprep.subr.mxu0 0.0
    %1219 = vmatpush1.xpose.msra.mxu0 0.0
    %1220 = vmatprep.subr.mxu0 0.0
    %1221 = vmatpush1.xpose.msra.mxu0 0.0
    %1222 = vmatprep.subr.mxu0 0.0
    %1223 = vmatpush1.xpose.msra.mxu0 0.0
    %1224 = vmatprep.subr.mxu0 0.0
    %1225 = vmatpush1.xpose.msra.mxu0 0.0
    %1226 = vmatprep.subr.mxu0 0.0
    %1227 = vmatpush1.xpose.msra.mxu0 0.0
    %1228 = vmatprep.subr.mxu0 0.0
    %1229 = vmatpush1.xpose.msra.mxu0 0.0
    %1230 = vmatprep.subr.mxu0 0.0
    %1231 = vmatpush1.xpose.msra.mxu0 0.0
    %1232 = vmatprep.subr.mxu0 0.0
    %1233 = vmatpush1.xpose.msra.mxu0 0.0
    %1234 = vmatprep.subr.mxu0 0.0
    %1235 = vmatpush1.xpose.msra.mxu0 0.0
    %1236 = vmatprep.subr.mxu0 0.0
    %1237 = vmatpush1.xpose.msra.mxu0 0.0
    %1238 = vmatprep.subr.mxu0 0.0
    %1239 = vmatpush1.xpose.msra.mxu0 0.0
    %1240 = vmatprep.subr.mxu0 0.0
    %1241 = vmatpush1.xpose.msra.mxu0 0.0
    %1242 = vmatprep.subr.mxu0 0.0
    %1243 = vmatpush1.xpose.msra.mxu0 0.0
    %1244 = vmatprep.subr.mxu0 0.0
    %1245 = vmatpush1.xpose.msra.mxu0 0.0
    %1246 = vmatprep.subr.mxu0 0.0
    %1247 = vmatpush1.xpose.msra.mxu0 0.0
    %1248 = vmatprep.subr.mxu0 0.0
    %1249 = vmatpush1.xpose.msra.mxu0 %v1216
    %1250 = vmatprep.subr.mxu0 0.0
    %1251 = vmatpush2.xpose.msra.mxu0 0.0
    %1252 = vmatprep.subr.mxu0 0.0
    %1253 = vmatpush2.xpose.msra.mxu0 0.0
    %1254 = vmatprep.subr.mxu0 0.0
    %1255 = vmatpush2.xpose.msra.mxu0 0.0
    %1256 = vmatprep.subr.mxu0 0.0
    %1257 = vmatpush2.xpose.msra.mxu0 0.0
    %1258 = vmatprep.subr.mxu0 0.0
    %1259 = vmatpush2.xpose.msra.mxu0 0.0
    %1260 = vmatprep.subr.mxu0 0.0
    %1261 = vmatpush2.xpose.msra.mxu0 0.0
    %1262 = vmatprep.subr.mxu0 0.0
    %1263 = vmatpush2.xpose.msra.mxu0 0.0
    %1264 = vmatprep.subr.mxu0 0.0
    %1265 = vmatpush2.xpose.msra.mxu0 0.0
    %1266 = vmatprep.subr.mxu0 0.0
    %1267 = vmatpush2.xpose.msra.mxu0 0.0
    %1268 = vmatprep.subr.mxu0 0.0
    %1269 = vmatpush2.xpose.msra.mxu0 0.0
    %1270 = vmatprep.subr.mxu0 0.0
    %1271 = vmatpush2.xpose.msra.mxu0 0.0
    %1272 = vmatprep.subr.mxu0 0.0
    %1273 = vmatpush2.xpose.msra.mxu0 0.0
    %1274 = vmatprep.subr.mxu0 0.0
    %1275 = vmatpush2.xpose.msra.mxu0 0.0
    %1276 = vmatprep.subr.mxu0 0.0
    %1277 = vmatpush2.xpose.msra.mxu0 0.0
    %1278 = vmatprep.subr.mxu0 0.0
    %1279 = vmatpush2.xpose.msra.mxu0 0.0
    %1280 = vmatprep.subr.mxu0 0.0
    %1281 = vmatpush2.xpose.msra.mxu0 0.0
    %1282 = vmatprep.mubr.f32.mxu0 0.0
    %1283 = vmatmul.mubr.f32.gmra.mxu0 %v1213
    %v1284 = vpop.f32.mrf.mxu0
    %v1285 = vadd.f32 0.0, %v1284
    %v1286 = vpop.f32.mrf.mxu0
    %1287 = vdwg.mxu0
    %v1289 = vsel %vm448, %v154, 0
    %v1292 = vsel %vm448, %v1130, 0
    %1294 = vmatprep.subr.mxu0 0.0
    %1295 = vmatpush1.xpose.msra.mxu0 0.0
    %1296 = vmatprep.subr.mxu0 0.0
    %1297 = vmatpush1.xpose.msra.mxu0 0.0
    %1298 = vmatprep.subr.mxu0 0.0
    %1299 = vmatpush1.xpose.msra.mxu0 0.0
    %1300 = vmatprep.subr.mxu0 0.0
    %1301 = vmatpush1.xpose.msra.mxu0 0.0
    %1302 = vmatprep.subr.mxu0 0.0
    %1303 = vmatpush1.xpose.msra.mxu0 0.0
    %1304 = vmatprep.subr.mxu0 0.0
    %1305 = vmatpush1.xpose.msra.mxu0 0.0
    %1306 = vmatprep.subr.mxu0 0.0
    %1307 = vmatpush1.xpose.msra.mxu0 0.0
    %1308 = vmatprep.subr.mxu0 0.0
    %1309 = vmatpush1.xpose.msra.mxu0 0.0
    %1310 = vmatprep.subr.mxu0 0.0
    %1311 = vmatpush1.xpose.msra.mxu0 0.0
    %1312 = vmatprep.subr.mxu0 0.0
    %1313 = vmatpush1.xpose.msra.mxu0 0.0
    %1314 = vmatprep.subr.mxu0 0.0
    %1315 = vmatpush1.xpose.msra.mxu0 0.0
    %1316 = vmatprep.subr.mxu0 0.0
    %1317 = vmatpush1.xpose.msra.mxu0 0.0
    %1318 = vmatprep.subr.mxu0 0.0
    %1319 = vmatpush1.xpose.msra.mxu0 0.0
    %1320 = vmatprep.subr.mxu0 0.0
    %1321 = vmatpush1.xpose.msra.mxu0 0.0
    %1322 = vmatprep.subr.mxu0 0.0
    %1323 = vmatpush1.xpose.msra.mxu0 0.0
    %1324 = vmatprep.subr.mxu0 0.0
    %1325 = vmatpush1.xpose.msra.mxu0 %v1292
    %1326 = vmatprep.subr.mxu0 0.0
    %1327 = vmatpush2.xpose.msra.mxu0 0.0
    %1328 = vmatprep.subr.mxu0 0.0
    %1329 = vmatpush2.xpose.msra.mxu0 0.0
    %1330 = vmatprep.subr.mxu0 0.0
    %1331 = vmatpush2.xpose.msra.mxu0 0.0
    %1332 = vmatprep.subr.mxu0 0.0
    %1333 = vmatpush2.xpose.msra.mxu0 0.0
    %1334 = vmatprep.subr.mxu0 0.0
    %1335 = vmatpush2.xpose.msra.mxu0 0.0
    %1336 = vmatprep.subr.mxu0 0.0
    %1337 = vmatpush2.xpose.msra.mxu0 0.0
    %1338 = vmatprep.subr.mxu0 0.0
    %1339 = vmatpush2.xpose.msra.mxu0 0.0
    %1340 = vmatprep.subr.mxu0 0.0
    %1341 = vmatpush2.xpose.msra.mxu0 0.0
    %1342 = vmatprep.subr.mxu0 0.0
    %1343 = vmatpush2.xpose.msra.mxu0 0.0
    %1344 = vmatprep.subr.mxu0 0.0
    %1345 = vmatpush2.xpose.msra.mxu0 0.0
    %1346 = vmatprep.subr.mxu0 0.0
    %1347 = vmatpush2.xpose.msra.mxu0 0.0
    %1348 = vmatprep.subr.mxu0 0.0
    %1349 = vmatpush2.xpose.msra.mxu0 0.0
    %1350 = vmatprep.subr.mxu0 0.0
    %1351 = vmatpush2.xpose.msra.mxu0 0.0
    %1352 = vmatprep.subr.mxu0 0.0
    %1353 = vmatpush2.xpose.msra.mxu0 0.0
    %1354 = vmatprep.subr.mxu0 0.0
    %1355 = vmatpush2.xpose.msra.mxu0 0.0
    %1356 = vmatprep.subr.mxu0 0.0
    %1357 = vmatpush2.xpose.msra.mxu0 0.0
    %1358 = vmatprep.mubr.f32.mxu0 0.0
    %1359 = vmatmul.mubr.f32.gmra.mxu0 %v1289
    %v1360 = vpop.f32.mrf.mxu0
    %v1361 = vadd.f32 0.0, %v1360
    %v1362 = vpop.f32.mrf.mxu0
    %1363 = vdwg.mxu0
    %v1365 = vsel %vm448, %v155, 0
    %v1368 = vsel %vm448, %v1131, 0
    %1370 = vmatprep.subr.mxu0 0.0
    %1371 = vmatpush1.xpose.msra.mxu0 0.0
    %1372 = vmatprep.subr.mxu0 0.0
    %1373 = vmatpush1.xpose.msra.mxu0 0.0
    %1374 = vmatprep.subr.mxu0 0.0
    %1375 = vmatpush1.xpose.msra.mxu0 0.0
    %1376 = vmatprep.subr.mxu0 0.0
    %1377 = vmatpush1.xpose.msra.mxu0 0.0
    %1378 = vmatprep.subr.mxu0 0.0
    %1379 = vmatpush1.xpose.msra.mxu0 0.0
    %1380 = vmatprep.subr.mxu0 0.0
    %1381 = vmatpush1.xpose.msra.mxu0 0.0
    %1382 = vmatprep.subr.mxu0 0.0
    %1383 = vmatpush1.xpose.msra.mxu0 0.0
    %1384 = vmatprep.subr.mxu0 0.0
    %1385 = vmatpush1.xpose.msra.mxu0 0.0
    %1386 = vmatprep.subr.mxu0 0.0
    %1387 = vmatpush1.xpose.msra.mxu0 0.0
    %1388 = vmatprep.subr.mxu0 0.0
    %1389 = vmatpush1.xpose.msra.mxu0 0.0
    %1390 = vmatprep.subr.mxu0 0.0
    %1391 = vmatpush1.xpose.msra.mxu0 0.0
    %1392 = vmatprep.subr.mxu0 0.0
    %1393 = vmatpush1.xpose.msra.mxu0 0.0
    %1394 = vmatprep.subr.mxu0 0.0
    %1395 = vmatpush1.xpose.msra.mxu0 0.0
    %1396 = vmatprep.subr.mxu0 0.0
    %1397 = vmatpush1.xpose.msra.mxu0 0.0
    %1398 = vmatprep.subr.mxu0 0.0
    %1399 = vmatpush1.xpose.msra.mxu0 0.0
    %1400 = vmatprep.subr.mxu0 0.0
    %1401 = vmatpush1.xpose.msra.mxu0 %v1368
    %1402 = vmatprep.subr.mxu0 0.0
    %1403 = vmatpush2.xpose.msra.mxu0 0.0
    %1404 = vmatprep.subr.mxu0 0.0
    %1405 = vmatpush2.xpose.msra.mxu0 0.0
    %1406 = vmatprep.subr.mxu0 0.0
    %1407 = vmatpush2.xpose.msra.mxu0 0.0
    %1408 = vmatprep.subr.mxu0 0.0
    %1409 = vmatpush2.xpose.msra.mxu0 0.0
    %1410 = vmatprep.subr.mxu0 0.0
    %1411 = vmatpush2.xpose.msra.mxu0 0.0
    %1412 = vmatprep.subr.mxu0 0.0
    %1413 = vmatpush2.xpose.msra.mxu0 0.0
    %1414 = vmatprep.subr.mxu0 0.0
    %1415 = vmatpush2.xpose.msra.mxu0 0.0
    %1416 = vmatprep.subr.mxu0 0.0
    %1417 = vmatpush2.xpose.msra.mxu0 0.0
    %1418 = vmatprep.subr.mxu0 0.0
    %1419 = vmatpush2.xpose.msra.mxu0 0.0
    %1420 = vmatprep.subr.mxu0 0.0
    %1421 = vmatpush2.xpose.msra.mxu0 0.0
    %1422 = vmatprep.subr.mxu0 0.0
    %1423 = vmatpush2.xpose.msra.mxu0 0.0
    %1424 = vmatprep.subr.mxu0 0.0
    %1425 = vmatpush2.xpose.msra.mxu0 0.0
    %1426 = vmatprep.subr.mxu0 0.0
    %1427 = vmatpush2.xpose.msra.mxu0 0.0
    %1428 = vmatprep.subr.mxu0 0.0
    %1429 = vmatpush2.xpose.msra.mxu0 0.0
    %1430 = vmatprep.subr.mxu0 0.0
    %1431 = vmatpush2.xpose.msra.mxu0 0.0
    %1432 = vmatprep.subr.mxu0 0.0
    %1433 = vmatpush2.xpose.msra.mxu0 0.0
    %1434 = vmatprep.mubr.f32.mxu0 0.0
    %1435 = vmatmul.mubr.f32.gmra.mxu0 %v1365
    %v1436 = vpop.f32.mrf.mxu0
    %v1437 = vadd.f32 0.0, %v1436
    %v1438 = vpop.f32.mrf.mxu0
    %1439 = vdwg.mxu0
    %v1441 = vsel %vm448, %v184, 0
    %v1444 = vsel %vm448, %v1132, 0
    %1446 = vmatprep.subr.mxu0 0.0
    %1447 = vmatpush1.xpose.msra.mxu0 0.0
    %1448 = vmatprep.subr.mxu0 0.0
    %1449 = vmatpush1.xpose.msra.mxu0 0.0
    %1450 = vmatprep.subr.mxu0 0.0
    %1451 = vmatpush1.xpose.msra.mxu0 0.0
    %1452 = vmatprep.subr.mxu0 0.0
    %1453 = vmatpush1.xpose.msra.mxu0 0.0
    %1454 = vmatprep.subr.mxu0 0.0
    %1455 = vmatpush1.xpose.msra.mxu0 0.0
    %1456 = vmatprep.subr.mxu0 0.0
    %1457 = vmatpush1.xpose.msra.mxu0 0.0
    %1458 = vmatprep.subr.mxu0 0.0
    %1459 = vmatpush1.xpose.msra.mxu0 0.0
    %1460 = vmatprep.subr.mxu0 0.0
    %1461 = vmatpush1.xpose.msra.mxu0 0.0
    %1462 = vmatprep.subr.mxu0 0.0
    %1463 = vmatpush1.xpose.msra.mxu0 0.0
    %1464 = vmatprep.subr.mxu0 0.0
    %1465 = vmatpush1.xpose.msra.mxu0 0.0
    %1466 = vmatprep.subr.mxu0 0.0
    %1467 = vmatpush1.xpose.msra.mxu0 0.0
    %1468 = vmatprep.subr.mxu0 0.0
    %1469 = vmatpush1.xpose.msra.mxu0 0.0
    %1470 = vmatprep.subr.mxu0 0.0
    %1471 = vmatpush1.xpose.msra.mxu0 0.0
    %1472 = vmatprep.subr.mxu0 0.0
    %1473 = vmatpush1.xpose.msra.mxu0 0.0
    %1474 = vmatprep.subr.mxu0 0.0
    %1475 = vmatpush1.xpose.msra.mxu0 0.0
    %1476 = vmatprep.subr.mxu0 0.0
    %1477 = vmatpush1.xpose.msra.mxu0 %v1444
    %1478 = vmatprep.subr.mxu0 0.0
    %1479 = vmatpush2.xpose.msra.mxu0 0.0
    %1480 = vmatprep.subr.mxu0 0.0
    %1481 = vmatpush2.xpose.msra.mxu0 0.0
    %1482 = vmatprep.subr.mxu0 0.0
    %1483 = vmatpush2.xpose.msra.mxu0 0.0
    %1484 = vmatprep.subr.mxu0 0.0
    %1485 = vmatpush2.xpose.msra.mxu0 0.0
    %1486 = vmatprep.subr.mxu0 0.0
    %1487 = vmatpush2.xpose.msra.mxu0 0.0
    %1488 = vmatprep.subr.mxu0 0.0
    %1489 = vmatpush2.xpose.msra.mxu0 0.0
    %1490 = vmatprep.subr.mxu0 0.0
    %1491 = vmatpush2.xpose.msra.mxu0 0.0
    %1492 = vmatprep.subr.mxu0 0.0
    %1493 = vmatpush2.xpose.msra.mxu0 0.0
    %1494 = vmatprep.subr.mxu0 0.0
    %1495 = vmatpush2.xpose.msra.mxu0 0.0
    %1496 = vmatprep.subr.mxu0 0.0
    %1497 = vmatpush2.xpose.msra.mxu0 0.0
    %1498 = vmatprep.subr.mxu0 0.0
    %1499 = vmatpush2.xpose.msra.mxu0 0.0
    %1500 = vmatprep.subr.mxu0 0.0
    %1501 = vmatpush2.xpose.msra.mxu0 0.0
    %1502 = vmatprep.subr.mxu0 0.0
    %1503 = vmatpush2.xpose.msra.mxu0 0.0
    %1504 = vmatprep.subr.mxu0 0.0
    %1505 = vmatpush2.xpose.msra.mxu0 0.0
    %1506 = vmatprep.subr.mxu0 0.0
    %1507 = vmatpush2.xpose.msra.mxu0 0.0
    %1508 = vmatprep.subr.mxu0 0.0
    %1509 = vmatpush2.xpose.msra.mxu0 0.0
    %1510 = vmatprep.mubr.f32.mxu0 0.0
    %1511 = vmatmul.mubr.f32.gmra.mxu0 %v1441
    %v1512 = vpop.f32.mrf.mxu0
    %v1513 = vadd.f32 0.0, %v1512
    %v1514 = vpop.f32.mrf.mxu0
    %1515 = vdwg.mxu0
    %v1517 = vsel %vm448, %v185, 0
    %v1520 = vsel %vm448, %v1133, 0
    %1522 = vmatprep.subr.mxu0 0.0
    %1523 = vmatpush1.xpose.msra.mxu0 0.0
    %1524 = vmatprep.subr.mxu0 0.0
    %1525 = vmatpush1.xpose.msra.mxu0 0.0
    %1526 = vmatprep.subr.mxu0 0.0
    %1527 = vmatpush1.xpose.msra.mxu0 0.0
    %1528 = vmatprep.subr.mxu0 0.0
    %1529 = vmatpush1.xpose.msra.mxu0 0.0
    %1530 = vmatprep.subr.mxu0 0.0
    %1531 = vmatpush1.xpose.msra.mxu0 0.0
    %1532 = vmatprep.subr.mxu0 0.0
    %1533 = vmatpush1.xpose.msra.mxu0 0.0
    %1534 = vmatprep.subr.mxu0 0.0
    %1535 = vmatpush1.xpose.msra.mxu0 0.0
    %1536 = vmatprep.subr.mxu0 0.0
    %1537 = vmatpush1.xpose.msra.mxu0 0.0
    %1538 = vmatprep.subr.mxu0 0.0
    %1539 = vmatpush1.xpose.msra.mxu0 0.0
    %1540 = vmatprep.subr.mxu0 0.0
    %1541 = vmatpush1.xpose.msra.mxu0 0.0
    %1542 = vmatprep.subr.mxu0 0.0
    %1543 = vmatpush1.xpose.msra.mxu0 0.0
    %1544 = vmatprep.subr.mxu0 0.0
    %1545 = vmatpush1.xpose.msra.mxu0 0.0
    %1546 = vmatprep.subr.mxu0 0.0
    %1547 = vmatpush1.xpose.msra.mxu0 0.0
    %1548 = vmatprep.subr.mxu0 0.0
    %1549 = vmatpush1.xpose.msra.mxu0 0.0
    %1550 = vmatprep.subr.mxu0 0.0
    %1551 = vmatpush1.xpose.msra.mxu0 0.0
    %1552 = vmatprep.subr.mxu0 0.0
    %1553 = vmatpush1.xpose.msra.mxu0 %v1520
    %1554 = vmatprep.subr.mxu0 0.0
    %1555 = vmatpush2.xpose.msra.mxu0 0.0
    %1556 = vmatprep.subr.mxu0 0.0
    %1557 = vmatpush2.xpose.msra.mxu0 0.0
    %1558 = vmatprep.subr.mxu0 0.0
    %1559 = vmatpush2.xpose.msra.mxu0 0.0
    %1560 = vmatprep.subr.mxu0 0.0
    %1561 = vmatpush2.xpose.msra.mxu0 0.0
    %1562 = vmatprep.subr.mxu0 0.0
    %1563 = vmatpush2.xpose.msra.mxu0 0.0
    %1564 = vmatprep.subr.mxu0 0.0
    %1565 = vmatpush2.xpose.msra.mxu0 0.0
    %1566 = vmatprep.subr.mxu0 0.0
    %1567 = vmatpush2.xpose.msra.mxu0 0.0
    %1568 = vmatprep.subr.mxu0 0.0
    %1569 = vmatpush2.xpose.msra.mxu0 0.0
    %1570 = vmatprep.subr.mxu0 0.0
    %1571 = vmatpush2.xpose.msra.mxu0 0.0
    %1572 = vmatprep.subr.mxu0 0.0
    %1573 = vmatpush2.xpose.msra.mxu0 0.0
    %1574 = vmatprep.subr.mxu0 0.0
    %1575 = vmatpush2.xpose.msra.mxu0 0.0
    %1576 = vmatprep.subr.mxu0 0.0
    %1577 = vmatpush2.xpose.msra.mxu0 0.0
    %1578 = vmatprep.subr.mxu0 0.0
    %1579 = vmatpush2.xpose.msra.mxu0 0.0
    %1580 = vmatprep.subr.mxu0 0.0
    %1581 = vmatpush2.xpose.msra.mxu0 0.0
    %1582 = vmatprep.subr.mxu0 0.0
    %1583 = vmatpush2.xpose.msra.mxu0 0.0
    %1584 = vmatprep.subr.mxu0 0.0
    %1585 = vmatpush2.xpose.msra.mxu0 0.0
    %1586 = vmatprep.mubr.f32.mxu0 0.0
    %1587 = vmatmul.mubr.f32.gmra.mxu0 %v1517
    %v1588 = vpop.f32.mrf.mxu0
    %v1589 = vadd.f32 0.0, %v1588
    %v1590 = vpop.f32.mrf.mxu0
    %1591 = vdwg.mxu0
    %v1593 = vsel %vm448, %v186, 0
    %v1596 = vsel %vm448, %v1134, 0
    %1598 = vmatprep.subr.mxu0 0.0
    %1599 = vmatpush1.xpose.msra.mxu0 0.0
    %1600 = vmatprep.subr.mxu0 0.0
    %1601 = vmatpush1.xpose.msra.mxu0 0.0
    %1602 = vmatprep.subr.mxu0 0.0
    %1603 = vmatpush1.xpose.msra.mxu0 0.0
    %1604 = vmatprep.subr.mxu0 0.0
    %1605 = vmatpush1.xpose.msra.mxu0 0.0
    %1606 = vmatprep.subr.mxu0 0.0
    %1607 = vmatpush1.xpose.msra.mxu0 0.0
    %1608 = vmatprep.subr.mxu0 0.0
    %1609 = vmatpush1.xpose.msra.mxu0 0.0
    %1610 = vmatprep.subr.mxu0 0.0
    %1611 = vmatpush1.xpose.msra.mxu0 0.0
    %1612 = vmatprep.subr.mxu0 0.0
    %1613 = vmatpush1.xpose.msra.mxu0 0.0
    %1614 = vmatprep.subr.mxu0 0.0
    %1615 = vmatpush1.xpose.msra.mxu0 0.0
    %1616 = vmatprep.subr.mxu0 0.0
    %1617 = vmatpush1.xpose.msra.mxu0 0.0
    %1618 = vmatprep.subr.mxu0 0.0
    %1619 = vmatpush1.xpose.msra.mxu0 0.0
    %1620 = vmatprep.subr.mxu0 0.0
    %1621 = vmatpush1.xpose.msra.mxu0 0.0
    %1622 = vmatprep.subr.mxu0 0.0
    %1623 = vmatpush1.xpose.msra.mxu0 0.0
    %1624 = vmatprep.subr.mxu0 0.0
    %1625 = vmatpush1.xpose.msra.mxu0 0.0
    %1626 = vmatprep.subr.mxu0 0.0
    %1627 = vmatpush1.xpose.msra.mxu0 0.0
    %1628 = vmatprep.subr.mxu0 0.0
    %1629 = vmatpush1.xpose.msra.mxu0 %v1596
    %1630 = vmatprep.subr.mxu0 0.0
    %1631 = vmatpush2.xpose.msra.mxu0 0.0
    %1632 = vmatprep.subr.mxu0 0.0
    %1633 = vmatpush2.xpose.msra.mxu0 0.0
    %1634 = vmatprep.subr.mxu0 0.0
    %1635 = vmatpush2.xpose.msra.mxu0 0.0
    %1636 = vmatprep.subr.mxu0 0.0
    %1637 = vmatpush2.xpose.msra.mxu0 0.0
    %1638 = vmatprep.subr.mxu0 0.0
    %1639 = vmatpush2.xpose.msra.mxu0 0.0
    %1640 = vmatprep.subr.mxu0 0.0
    %1641 = vmatpush2.xpose.msra.mxu0 0.0
    %1642 = vmatprep.subr.mxu0 0.0
    %1643 = vmatpush2.xpose.msra.mxu0 0.0
    %1644 = vmatprep.subr.mxu0 0.0
    %1645 = vmatpush2.xpose.msra.mxu0 0.0
    %1646 = vmatprep.subr.mxu0 0.0
    %1647 = vmatpush2.xpose.msra.mxu0 0.0
    %1648 = vmatprep.subr.mxu0 0.0
    %1649 = vmatpush2.xpose.msra.mxu0 0.0
    %1650 = vmatprep.subr.mxu0 0.0
    %1651 = vmatpush2.xpose.msra.mxu0 0.0
    %1652 = vmatprep.subr.mxu0 0.0
    %1653 = vmatpush2.xpose.msra.mxu0 0.0
    %1654 = vmatprep.subr.mxu0 0.0
    %1655 = vmatpush2.xpose.msra.mxu0 0.0
    %1656 = vmatprep.subr.mxu0 0.0
    %1657 = vmatpush2.xpose.msra.mxu0 0.0
    %1658 = vmatprep.subr.mxu0 0.0
    %1659 = vmatpush2.xpose.msra.mxu0 0.0
    %1660 = vmatprep.subr.mxu0 0.0
    %1661 = vmatpush2.xpose.msra.mxu0 0.0
    %1662 = vmatprep.mubr.f32.mxu0 0.0
    %1663 = vmatmul.mubr.f32.gmra.mxu0 %v1593
    %v1664 = vpop.f32.mrf.mxu0
    %v1665 = vadd.f32 0.0, %v1664
    %v1666 = vpop.f32.mrf.mxu0
    %1667 = vdwg.mxu0
    %v1669 = vsel %vm448, %v187, 0
    %v1672 = vsel %vm448, %v1135, 0
    %1674 = vmatprep.subr.mxu0 0.0
    %1675 = vmatpush1.xpose.msra.mxu0 0.0
    %1676 = vmatprep.subr.mxu0 0.0
    %1677 = vmatpush1.xpose.msra.mxu0 0.0
    %1678 = vmatprep.subr.mxu0 0.0
    %1679 = vmatpush1.xpose.msra.mxu0 0.0
    %1680 = vmatprep.subr.mxu0 0.0
    %1681 = vmatpush1.xpose.msra.mxu0 0.0
    %1682 = vmatprep.subr.mxu0 0.0
    %1683 = vmatpush1.xpose.msra.mxu0 0.0
    %1684 = vmatprep.subr.mxu0 0.0
    %1685 = vmatpush1.xpose.msra.mxu0 0.0
    %1686 = vmatprep.subr.mxu0 0.0
    %1687 = vmatpush1.xpose.msra.mxu0 0.0
    %1688 = vmatprep.subr.mxu0 0.0
    %1689 = vmatpush1.xpose.msra.mxu0 0.0
    %1690 = vmatprep.subr.mxu0 0.0
    %1691 = vmatpush1.xpose.msra.mxu0 0.0
    %1692 = vmatprep.subr.mxu0 0.0
    %1693 = vmatpush1.xpose.msra.mxu0 0.0
    %1694 = vmatprep.subr.mxu0 0.0
    %1695 = vmatpush1.xpose.msra.mxu0 0.0
    %1696 = vmatprep.subr.mxu0 0.0
    %1697 = vmatpush1.xpose.msra.mxu0 0.0
    %1698 = vmatprep.subr.mxu0 0.0
    %1699 = vmatpush1.xpose.msra.mxu0 0.0
    %1700 = vmatprep.subr.mxu0 0.0
    %1701 = vmatpush1.xpose.msra.mxu0 0.0
    %1702 = vmatprep.subr.mxu0 0.0
    %1703 = vmatpush1.xpose.msra.mxu0 0.0
    %1704 = vmatprep.subr.mxu0 0.0
    %1705 = vmatpush1.xpose.msra.mxu0 %v1672
    %1706 = vmatprep.subr.mxu0 0.0
    %1707 = vmatpush2.xpose.msra.mxu0 0.0
    %1708 = vmatprep.subr.mxu0 0.0
    %1709 = vmatpush2.xpose.msra.mxu0 0.0
    %1710 = vmatprep.subr.mxu0 0.0
    %1711 = vmatpush2.xpose.msra.mxu0 0.0
    %1712 = vmatprep.subr.mxu0 0.0
    %1713 = vmatpush2.xpose.msra.mxu0 0.0
    %1714 = vmatprep.subr.mxu0 0.0
    %1715 = vmatpush2.xpose.msra.mxu0 0.0
    %1716 = vmatprep.subr.mxu0 0.0
    %1717 = vmatpush2.xpose.msra.mxu0 0.0
    %1718 = vmatprep.subr.mxu0 0.0
    %1719 = vmatpush2.xpose.msra.mxu0 0.0
    %1720 = vmatprep.subr.mxu0 0.0
    %1721 = vmatpush2.xpose.msra.mxu0 0.0
    %1722 = vmatprep.subr.mxu0 0.0
    %1723 = vmatpush2.xpose.msra.mxu0 0.0
    %1724 = vmatprep.subr.mxu0 0.0
    %1725 = vmatpush2.xpose.msra.mxu0 0.0
    %1726 = vmatprep.subr.mxu0 0.0
    %1727 = vmatpush2.xpose.msra.mxu0 0.0
    %1728 = vmatprep.subr.mxu0 0.0
    %1729 = vmatpush2.xpose.msra.mxu0 0.0
    %1730 = vmatprep.subr.mxu0 0.0
    %1731 = vmatpush2.xpose.msra.mxu0 0.0
    %1732 = vmatprep.subr.mxu0 0.0
    %1733 = vmatpush2.xpose.msra.mxu0 0.0
    %1734 = vmatprep.subr.mxu0 0.0
    %1735 = vmatpush2.xpose.msra.mxu0 0.0
    %1736 = vmatprep.subr.mxu0 0.0
    %1737 = vmatpush2.xpose.msra.mxu0 0.0
    %1738 = vmatprep.mubr.f32.mxu0 0.0
    %1739 = vmatmul.mubr.f32.gmra.mxu0 %v1669
    %v1740 = vpop.f32.mrf.mxu0
    %v1741 = vadd.f32 0.0, %v1740
    %v1742 = vpop.f32.mrf.mxu0
    %1743 = vdwg.mxu0
    %1744 = vxpose.xlu0.b32.start [1/16] %v1209, 128
    %1745 = vxpose.xlu0.b32.cont [2/16] %v1285, 128
    %1746 = vxpose.xlu0.b32.cont [3/16] %v1361, 128
    %1747 = vxpose.xlu0.b32.cont [4/16] %v1437, 128
    %1748 = vxpose.xlu0.b32.cont [5/16] 0.0, 128
    %1749 = vxpose.xlu0.b32.cont [6/16] 0.0, 128
    %1750 = vxpose.xlu0.b32.cont [7/16] 0.0, 128
    %1751 = vxpose.xlu0.b32.cont [8/16] 0.0, 128
    %1752 = vxpose.xlu0.b32.cont [9/16] 0.0, 128
    %1753 = vxpose.xlu0.b32.cont [10/16] 0.0, 128
    %1754 = vxpose.xlu0.b32.cont [11/16] 0.0, 128
    %1755 = vxpose.xlu0.b32.cont [12/16] 0.0, 128
    %1756 = vxpose.xlu0.b32.cont [13/16] 0.0, 128
    %1757 = vxpose.xlu0.b32.cont [14/16] 0.0, 128
    %1758 = vxpose.xlu0.b32.cont [15/16] 0.0, 128
    %1759 = vxpose.xlu0.b32.end [16/16] 0.0, 128
    %v1760 = vpop.trf.xlu0
    %v1761 = vpop.trf.xlu0
    %v1762 = vpop.trf.xlu0
    %v1763 = vpop.trf.xlu0
    %v1764 = vpop.trf.xlu0
    %v1765 = vpop.trf.xlu0
    %v1766 = vpop.trf.xlu0
    %v1767 = vpop.trf.xlu0
    %v1768 = vpop.trf.xlu0
    %v1769 = vpop.trf.xlu0
    %v1770 = vpop.trf.xlu0
    %v1771 = vpop.trf.xlu0
    %v1772 = vpop.trf.xlu0
    %v1773 = vpop.trf.xlu0
    %v1774 = vpop.trf.xlu0
    %v1775 = vpop.trf.xlu0
    %1776 = vxpose.xlu0.b32.start [1/16] %v1513, 128
    %1777 = vxpose.xlu0.b32.cont [2/16] %v1589, 128
    %1778 = vxpose.xlu0.b32.cont [3/16] %v1665, 128
    %1779 = vxpose.xlu0.b32.cont [4/16] %v1741, 128
    %1780 = vxpose.xlu0.b32.cont [5/16] 0.0, 128
    %1781 = vxpose.xlu0.b32.cont [6/16] 0.0, 128
    %1782 = vxpose.xlu0.b32.cont [7/16] 0.0, 128
    %1783 = vxpose.xlu0.b32.cont [8/16] 0.0, 128
    %1784 = vxpose.xlu0.b32.cont [9/16] 0.0, 128
    %1785 = vxpose.xlu0.b32.cont [10/16] 0.0, 128
    %1786 = vxpose.xlu0.b32.cont [11/16] 0.0, 128
    %1787 = vxpose.xlu0.b32.cont [12/16] 0.0, 128
    %1788 = vxpose.xlu0.b32.cont [13/16] 0.0, 128
    %1789 = vxpose.xlu0.b32.cont [14/16] 0.0, 128
    %1790 = vxpose.xlu0.b32.cont [15/16] 0.0, 128
    %1791 = vxpose.xlu0.b32.end [16/16] 0.0, 128
    %v1792 = vpop.trf.xlu0
    %v1793 = vpop.trf.xlu0
    %v1794 = vpop.trf.xlu0
    %v1795 = vpop.trf.xlu0
    %v1796 = vpop.trf.xlu0
    %v1797 = vpop.trf.xlu0
    %v1798 = vpop.trf.xlu0
    %v1799 = vpop.trf.xlu0
    %v1800 = vpop.trf.xlu0
    %v1801 = vpop.trf.xlu0
    %v1802 = vpop.trf.xlu0
    %v1803 = vpop.trf.xlu0
    %v1804 = vpop.trf.xlu0
    %v1805 = vpop.trf.xlu0
    %v1806 = vpop.trf.xlu0
    %v1807 = vpop.trf.xlu0
    %1808 = vst.msk [vmem:[#allocation7] sm:$0xff] %vm46, %v1760
    %1809 = vst.msk [vmem:[#allocation7 + $0x8] sm:$0xff] %vm46, %v1792
    // Predicated region
    $region18: #{tpu_custom_call.1} parent=1 // pred_check
      _
    $region19: #{tpu_custom_call.1} parent=1 // pred_check_branch
      %1811 = sbr.rel (0) target = $region21
    $region20: #{tpu_custom_call.1} parent=1 // pred_region
      %s1813 = ssub.s32 256, 256
      %1814 = vsyncadd [#allocation4], %s1813
      %s1815 = sshll.u32 [#allocation7], 4
      %s1816 = int_to_ptr.vmem [resolvable:$true] %s1815
      %1821 = dma.vmem_to_hbm [thread:$0]  %s1816, 256, %s2, [#allocation4], 128, 128, 8
    $region21: #{tpu_custom_call.1} parent=1 // pred_fallthru
      _
    // Predicated region
    $region22: #{tpu_custom_call.1} parent=1 // pred_check
      _
    $region23: #{tpu_custom_call.1} parent=1 // pred_check_branch
      %1823 = sbr.rel (0) target = $region25
    $region24: #{tpu_custom_call.1} parent=1 // pred_region
      %1824 = dma.done [#allocation4], 256
    $region25: #{tpu_custom_call.1} parent=1 // pred_fallthru
      _
    %1825 = vsyncpa [#allocation3], 1
    %1826 = vsyncpa [#allocation6], 1
    %1827 = vsyncpa [#allocation4], 1

</llo_original>
